<compile_context>
chip_gen: v7x
topology: tpu7x:2x2x1
jax: 0.10.0
libtpu: 0.0.40
codegen_flags: <defaults>
</compile_context>

<pallas_src>
import functools

import jax
import jax.numpy as jnp
from jax.experimental import pallas as pl
from jax.experimental.pallas import tpu as pltpu

# Layer sizes from the PyTorch module definition.
_HIDDEN = (436, 436, 380, 260, 102)
_OUT_FEATURES = 4
_RRELU_SLOPE = (1.0 / 8.0 + 1.0 / 3.0) / 2.0  # 11/48
_LANE = 128


def _round_up(x, m):
    return (x + m - 1) // m * m


def _mlp_kernel(x_ref,
                w1, b1, w2, b2, w3, b3, w4, b4, w5, b5, w6, b6,
                o_ref):
    """One batch tile of the whole MLP: 6 bf16 MXU matmuls with f32 accumulation."""
    slope = jnp.float32(_RRELU_SLOPE)

    def layer(h_bf16, w_ref, b_ref):
        # bf16 @ bf16 -> f32 accumulate on the MXU; bias add in f32 on the VPU.
        return jnp.dot(h_bf16, w_ref[...],
                       preferred_element_type=jnp.float32) + b_ref[...]

    def act(a_f32):
        # Eval-mode RReLU == LeakyReLU(11/48), done in f32; cast back to bf16
        # only as the next MXU operand (v5e VPU has no bf16 path).
        return jnp.where(a_f32 >= 0.0, a_f32, slope * a_f32).astype(jnp.bfloat16)

    h = x_ref[...]                      # (tile_b, in_pad), bf16
    h = act(layer(h, w1, b1))           # Linear(in, 436) + RReLU   (Dropout(0.2) = id)
    h = act(layer(h, w2, b2))           # Linear(436, 436) + RReLU  (Dropout(0.3) = id)
    h = act(layer(h, w3, b3))           # Linear(436, 380) + RReLU  (Dropout(0.4) = id)
    h = act(layer(h, w4, b4))           # Linear(380, 260) + RReLU  (Dropout(0.2) = id)
    h = act(layer(h, w5, b5))           # Linear(260, 102) + RReLU
    o_ref[...] = layer(h, w6, b6)       # Linear(102, 4), lane-padded to 128, f32


def init_params(key, in_features):
    """Deterministic init mimicking PyTorch nn.Linear: U(-1/sqrt(fan_in), +1/sqrt(fan_in))."""
    dims = (in_features,) + _HIDDEN + (_OUT_FEATURES,)
    params = []
    for i in range(len(dims) - 1):
        fan_in, fan_out = dims[i], dims[i + 1]
        key, kw, kb = jax.random.split(key, 3)
        bound = 1.0 / jnp.sqrt(jnp.float32(fan_in))
        # Stored pre-transposed: [fan_in, fan_out].
        w = jax.random.uniform(kw, (fan_in, fan_out), jnp.float32, -bound, bound)
        b = jax.random.uniform(kb, (1, fan_out), jnp.float32, -bound, bound)
        params.extend([w, b])
    return tuple(params)


def prepare_params(params, in_features):
    """Zero-pad every layer to lane multiples; weights -> bf16, biases stay f32."""
    dims = (in_features,) + _HIDDEN + (_OUT_FEATURES,)
    padded = tuple(_round_up(d, _LANE) for d in dims)
    prepped = []
    for i in range(len(dims) - 1):
        w, b = params[2 * i], params[2 * i + 1]
        wp = jnp.zeros((padded[i], padded[i + 1]), jnp.bfloat16)
        wp = wp.at[:dims[i], :dims[i + 1]].set(w.astype(jnp.bfloat16))
        bp = jnp.zeros((1, padded[i + 1]), jnp.float32)
        bp = bp.at[:, :dims[i + 1]].set(b)
        prepped.extend([wp, bp])
    return tuple(prepped)


@functools.partial(jax.jit, static_argnames=("in_features", "batch_tile"))
def nn_regressor_dropout_forward(x, prepped_params, in_features, batch_tile=512):
    """x: [batch, in_features] f32.  prepped_params: output of prepare_params()."""
    batch = x.shape[0]
    dims = (in_features,) + _HIDDEN + (_OUT_FEATURES,)
    in_pad = _round_up(in_features, _LANE)
    out_pad = _round_up(_OUT_FEATURES, _LANE)

    # Batch tile: 512 rows (fits comfortably in scoped VMEM on v5e/v6e/v7x);
    # small batches just use one full-batch tile rounded to a bf16 sublane pack.
    tile_b = batch_tile if batch >= batch_tile else _round_up(batch, 16)
    padded_batch = _round_up(batch, tile_b)

    # Pad input to a lane-dense bf16 slab (zeros are inert through the padded MLP).
    xp = jnp.zeros((padded_batch, in_pad), jnp.bfloat16)
    xp = xp.at[:batch, :in_features].set(x.astype(jnp.bfloat16))

    grid = (padded_batch // tile_b,)

    x_spec = pl.BlockSpec((tile_b, in_pad), lambda i: (i, 0))
    # Constant index maps -> weights/biases stay resident in VMEM across tiles.
    param_specs = [pl.BlockSpec(p.shape, lambda i: (0, 0)) for p in prepped_params]
    out_spec = pl.BlockSpec((tile_b, out_pad), lambda i: (i, 0))

    flops = 2 * batch * sum(dims[i] * dims[i + 1] for i in range(len(dims) - 1))
    bytes_accessed = (
        xp.size * 2
        + sum(int(p.size) * p.dtype.itemsize for p in prepped_params)
        + padded_batch * out_pad * 4
    )

    out = pl.pallas_call(
        _mlp_kernel,
        out_shape=jax.ShapeDtypeStruct((padded_batch, out_pad), jnp.float32),
        grid=grid,
        in_specs=[x_spec] + param_specs,
        out_specs=out_spec,
        compiler_params=pltpu.CompilerParams(
            dimension_semantics=("parallel",),
        ),
        cost_estimate=pl.CostEstimate(
            flops=flops, transcendentals=0, bytes_accessed=bytes_accessed),
    )(xp, *prepped_params)

    return out[:batch, :_OUT_FEATURES]


def _reference_forward(x, params):
    """Pure-JAX f32 reference (eval-mode semantics) for a sanity check."""
    h = x
    n_layers = len(params) // 2
    for i in range(n_layers):
        w, b = params[2 * i], params[2 * i + 1]
        h = h @ w + b
        if i < n_layers - 1:
            h = jnp.where(h >= 0.0, h, _RRELU_SLOPE * h)
    return h


if __name__ == "__main__":
    key = jax.random.PRNGKey(0)
    k_params, k_x = jax.random.split(key)

    batch, in_features = 8, 32
    params = init_params(k_params, in_features)
    prepped = prepare_params(params, in_features)
    x = jax.random.normal(k_x, (batch, in_features), jnp.float32)

    out = nn_regressor_dropout_forward(x, prepped, in_features)
    out = jax.block_until_ready(out)

    ref = _reference_forward(x, params)
    assert out.shape == (batch, _OUT_FEATURES)
    # Loosened tolerance: MXU operands are bf16 (accumulation in f32).
    assert jnp.allclose(out, ref, atol=2e-2, rtol=2e-2)

    print("KERNEL_OK")
</pallas_src>

<mosaic_0001>
module attributes {stable_mosaic.version = 11 : i64} {
  func.func @_mlp_kernel(%arg0: i32, %arg1: memref<16x128xbf16, #tpu.memory_space<vmem>>, %arg2: memref<128x512xbf16, #tpu.memory_space<vmem>>, %arg3: memref<1x512xf32, #tpu.memory_space<vmem>>, %arg4: memref<512x512xbf16, #tpu.memory_space<vmem>>, %arg5: memref<1x512xf32, #tpu.memory_space<vmem>>, %arg6: memref<512x384xbf16, #tpu.memory_space<vmem>>, %arg7: memref<1x384xf32, #tpu.memory_space<vmem>>, %arg8: memref<384x384xbf16, #tpu.memory_space<vmem>>, %arg9: memref<1x384xf32, #tpu.memory_space<vmem>>, %arg10: memref<384x128xbf16, #tpu.memory_space<vmem>>, %arg11: memref<1x128xf32, #tpu.memory_space<vmem>>, %arg12: memref<128x128xbf16, #tpu.memory_space<vmem>>, %arg13: memref<1x128xf32, #tpu.memory_space<vmem>>, %arg14: memref<16x128xf32, #tpu.memory_space<vmem>>) attributes {dimension_semantics = [#tpu.dimension_semantics<parallel>], iteration_bounds = array<i64: 1>, scalar_prefetch = 0 : i64, scratch_operands = 0 : i64, tpu.core_type = #tpu.core_type<tc>, window_params = [{transform_indices = @transform_0, window_bounds = array<i64: 16, 128>}, {pipeline_mode = #tpu.pipeline_mode<synchronous>, transform_indices = @transform_1, window_bounds = array<i64: 128, 512>}, {pipeline_mode = #tpu.pipeline_mode<synchronous>, transform_indices = @transform_2, window_bounds = array<i64: 1, 512>}, {pipeline_mode = #tpu.pipeline_mode<synchronous>, transform_indices = @transform_3, window_bounds = array<i64: 512, 512>}, {pipeline_mode = #tpu.pipeline_mode<synchronous>, transform_indices = @transform_4, window_bounds = array<i64: 1, 512>}, {pipeline_mode = #tpu.pipeline_mode<synchronous>, transform_indices = @transform_5, window_bounds = array<i64: 512, 384>}, {pipeline_mode = #tpu.pipeline_mode<synchronous>, transform_indices = @transform_6, window_bounds = array<i64: 1, 384>}, {pipeline_mode = #tpu.pipeline_mode<synchronous>, transform_indices = @transform_7, window_bounds = array<i64: 384, 384>}, {pipeline_mode = #tpu.pipeline_mode<synchronous>, transform_indices = @transform_8, window_bounds = array<i64: 1, 384>}, {pipeline_mode = #tpu.pipeline_mode<synchronous>, transform_indices = @transform_9, window_bounds = array<i64: 384, 128>}, {pipeline_mode = #tpu.pipeline_mode<synchronous>, transform_indices = @transform_10, window_bounds = array<i64: 1, 128>}, {pipeline_mode = #tpu.pipeline_mode<synchronous>, transform_indices = @transform_11, window_bounds = array<i64: 128, 128>}, {pipeline_mode = #tpu.pipeline_mode<synchronous>, transform_indices = @transform_12, window_bounds = array<i64: 1, 128>}, {transform_indices = @transform_13, window_bounds = array<i64: 16, 128>}]} {
    %c0 = arith.constant 0 : index
    %c0_0 = arith.constant 0 : index
    %0 = vector.load %arg1[%c0, %c0_0] : memref<16x128xbf16, #tpu.memory_space<vmem>>, vector<16x128xbf16>
    %c0_1 = arith.constant 0 : index
    %c0_2 = arith.constant 0 : index
    %1 = vector.load %arg2[%c0_1, %c0_2] : memref<128x512xbf16, #tpu.memory_space<vmem>>, vector<128x512xbf16>
    %cst = arith.constant dense<0.000000e+00> : vector<16x512xf32>
    %2 = tpu.matmul %0, %1, %cst {dimension_numbers = #tpu.dot_dimension_numbers<[1], [0], [0], [1], [0, 0, 1, 1], [], []>} : vector<16x128xbf16>, vector<128x512xbf16>, vector<16x512xf32> -> vector<16x512xf32>
    %c0_3 = arith.constant 0 : index
    %c0_4 = arith.constant 0 : index
    %3 = vector.load %arg3[%c0_3, %c0_4] : memref<1x512xf32, #tpu.memory_space<vmem>>, vector<1x512xf32>
    %4 = vector.broadcast %3 : vector<1x512xf32> to vector<16x512xf32>
    %5 = arith.addf %2, %4 : vector<16x512xf32>
    %cst_5 = arith.constant 0.000000e+00 : f32
    %6 = vector.broadcast %cst_5 : f32 to vector<16x512xf32>
    %7 = arith.cmpf oge, %5, %6 : vector<16x512xf32>
    %cst_6 = arith.constant 0.229166672 : f32
    %8 = vector.broadcast %cst_6 : f32 to vector<16x512xf32>
    %9 = arith.mulf %8, %5 : vector<16x512xf32>
    %10 = arith.select %7, %5, %9 : vector<16x512xi1>, vector<16x512xf32>
    %11 = arith.truncf %10 : vector<16x512xf32> to vector<16x512xbf16>
    %c0_7 = arith.constant 0 : index
    %c0_8 = arith.constant 0 : index
    %12 = vector.load %arg4[%c0_7, %c0_8] : memref<512x512xbf16, #tpu.memory_space<vmem>>, vector<512x512xbf16>
    %cst_9 = arith.constant dense<0.000000e+00> : vector<16x512xf32>
    %13 = tpu.matmul %11, %12, %cst_9 {dimension_numbers = #tpu.dot_dimension_numbers<[1], [0], [0], [1], [0, 0, 1, 1], [], []>} : vector<16x512xbf16>, vector<512x512xbf16>, vector<16x512xf32> -> vector<16x512xf32>
    %c0_10 = arith.constant 0 : index
    %c0_11 = arith.constant 0 : index
    %14 = vector.load %arg5[%c0_10, %c0_11] : memref<1x512xf32, #tpu.memory_space<vmem>>, vector<1x512xf32>
    %15 = vector.broadcast %14 : vector<1x512xf32> to vector<16x512xf32>
    %16 = arith.addf %13, %15 : vector<16x512xf32>
    %cst_12 = arith.constant 0.000000e+00 : f32
    %17 = vector.broadcast %cst_12 : f32 to vector<16x512xf32>
    %18 = arith.cmpf oge, %16, %17 : vector<16x512xf32>
    %cst_13 = arith.constant 0.229166672 : f32
    %19 = vector.broadcast %cst_13 : f32 to vector<16x512xf32>
    %20 = arith.mulf %19, %16 : vector<16x512xf32>
    %21 = arith.select %18, %16, %20 : vector<16x512xi1>, vector<16x512xf32>
    %22 = arith.truncf %21 : vector<16x512xf32> to vector<16x512xbf16>
    %c0_14 = arith.constant 0 : index
    %c0_15 = arith.constant 0 : index
    %23 = vector.load %arg6[%c0_14, %c0_15] : memref<512x384xbf16, #tpu.memory_space<vmem>>, vector<512x384xbf16>
    %cst_16 = arith.constant dense<0.000000e+00> : vector<16x384xf32>
    %24 = tpu.matmul %22, %23, %cst_16 {dimension_numbers = #tpu.dot_dimension_numbers<[1], [0], [0], [1], [0, 0, 1, 1], [], []>} : vector<16x512xbf16>, vector<512x384xbf16>, vector<16x384xf32> -> vector<16x384xf32>
    %c0_17 = arith.constant 0 : index
    %c0_18 = arith.constant 0 : index
    %25 = vector.load %arg7[%c0_17, %c0_18] : memref<1x384xf32, #tpu.memory_space<vmem>>, vector<1x384xf32>
    %26 = vector.broadcast %25 : vector<1x384xf32> to vector<16x384xf32>
    %27 = arith.addf %24, %26 : vector<16x384xf32>
    %cst_19 = arith.constant 0.000000e+00 : f32
    %28 = vector.broadcast %cst_19 : f32 to vector<16x384xf32>
    %29 = arith.cmpf oge, %27, %28 : vector<16x384xf32>
    %cst_20 = arith.constant 0.229166672 : f32
    %30 = vector.broadcast %cst_20 : f32 to vector<16x384xf32>
    %31 = arith.mulf %30, %27 : vector<16x384xf32>
    %32 = arith.select %29, %27, %31 : vector<16x384xi1>, vector<16x384xf32>
    %33 = arith.truncf %32 : vector<16x384xf32> to vector<16x384xbf16>
    %c0_21 = arith.constant 0 : index
    %c0_22 = arith.constant 0 : index
    %34 = vector.load %arg8[%c0_21, %c0_22] : memref<384x384xbf16, #tpu.memory_space<vmem>>, vector<384x384xbf16>
    %cst_23 = arith.constant dense<0.000000e+00> : vector<16x384xf32>
    %35 = tpu.matmul %33, %34, %cst_23 {dimension_numbers = #tpu.dot_dimension_numbers<[1], [0], [0], [1], [0, 0, 1, 1], [], []>} : vector<16x384xbf16>, vector<384x384xbf16>, vector<16x384xf32> -> vector<16x384xf32>
    %c0_24 = arith.constant 0 : index
    %c0_25 = arith.constant 0 : index
    %36 = vector.load %arg9[%c0_24, %c0_25] : memref<1x384xf32, #tpu.memory_space<vmem>>, vector<1x384xf32>
    %37 = vector.broadcast %36 : vector<1x384xf32> to vector<16x384xf32>
    %38 = arith.addf %35, %37 : vector<16x384xf32>
    %cst_26 = arith.constant 0.000000e+00 : f32
    %39 = vector.broadcast %cst_26 : f32 to vector<16x384xf32>
    %40 = arith.cmpf oge, %38, %39 : vector<16x384xf32>
    %cst_27 = arith.constant 0.229166672 : f32
    %41 = vector.broadcast %cst_27 : f32 to vector<16x384xf32>
    %42 = arith.mulf %41, %38 : vector<16x384xf32>
    %43 = arith.select %40, %38, %42 : vector<16x384xi1>, vector<16x384xf32>
    %44 = arith.truncf %43 : vector<16x384xf32> to vector<16x384xbf16>
    %c0_28 = arith.constant 0 : index
    %c0_29 = arith.constant 0 : index
    %45 = vector.load %arg10[%c0_28, %c0_29] : memref<384x128xbf16, #tpu.memory_space<vmem>>, vector<384x128xbf16>
    %cst_30 = arith.constant dense<0.000000e+00> : vector<16x128xf32>
    %46 = tpu.matmul %44, %45, %cst_30 {dimension_numbers = #tpu.dot_dimension_numbers<[1], [0], [0], [1], [0, 0, 1, 1], [], []>} : vector<16x384xbf16>, vector<384x128xbf16>, vector<16x128xf32> -> vector<16x128xf32>
    %c0_31 = arith.constant 0 : index
    %c0_32 = arith.constant 0 : index
    %47 = vector.load %arg11[%c0_31, %c0_32] : memref<1x128xf32, #tpu.memory_space<vmem>>, vector<1x128xf32>
    %48 = vector.broadcast %47 : vector<1x128xf32> to vector<16x128xf32>
    %49 = arith.addf %46, %48 : vector<16x128xf32>
    %cst_33 = arith.constant 0.000000e+00 : f32
    %50 = vector.broadcast %cst_33 : f32 to vector<16x128xf32>
    %51 = arith.cmpf oge, %49, %50 : vector<16x128xf32>
    %cst_34 = arith.constant 0.229166672 : f32
    %52 = vector.broadcast %cst_34 : f32 to vector<16x128xf32>
    %53 = arith.mulf %52, %49 : vector<16x128xf32>
    %54 = arith.select %51, %49, %53 : vector<16x128xi1>, vector<16x128xf32>
    %55 = arith.truncf %54 : vector<16x128xf32> to vector<16x128xbf16>
    %c0_35 = arith.constant 0 : index
    %c0_36 = arith.constant 0 : index
    %56 = vector.load %arg12[%c0_35, %c0_36] : memref<128x128xbf16, #tpu.memory_space<vmem>>, vector<128x128xbf16>
    %cst_37 = arith.constant dense<0.000000e+00> : vector<16x128xf32>
    %57 = tpu.matmul %55, %56, %cst_37 {dimension_numbers = #tpu.dot_dimension_numbers<[1], [0], [0], [1], [0, 0, 1, 1], [], []>} : vector<16x128xbf16>, vector<128x128xbf16>, vector<16x128xf32> -> vector<16x128xf32>
    %c0_38 = arith.constant 0 : index
    %c0_39 = arith.constant 0 : index
    %58 = vector.load %arg13[%c0_38, %c0_39] : memref<1x128xf32, #tpu.memory_space<vmem>>, vector<1x128xf32>
    %59 = vector.broadcast %58 : vector<1x128xf32> to vector<16x128xf32>
    %60 = arith.addf %57, %59 : vector<16x128xf32>
    %c0_40 = arith.constant 0 : index
    %c0_41 = arith.constant 0 : index
    %61 = vector.load %arg14[%c0_40, %c0_41] : memref<16x128xf32, #tpu.memory_space<vmem>>, vector<16x128xf32>
    tpu.vector_store %arg14[%c0_40, %c0_41], %60 {strides = array<i32>} : memref<16x128xf32, #tpu.memory_space<vmem>>, vector<16x128xf32>,
    return
  }
  func.func @transform_0(%arg0: i32) -> (i32, i32) {
    %c0_i32 = arith.constant 0 : i32
    %c0_i32_0 = arith.constant 0 : i32
    return %arg0, %c0_i32 : i32, i32
  }
  func.func @transform_1(%arg0: i32) -> (i32, i32) {
    %c0_i32 = arith.constant 0 : i32
    %c0_i32_0 = arith.constant 0 : i32
    %c0_i32_1 = arith.constant 0 : i32
    return %c0_i32, %c0_i32_0 : i32, i32
  }
  func.func @transform_2(%arg0: i32) -> (i32, i32) {
    %c0_i32 = arith.constant 0 : i32
    %c0_i32_0 = arith.constant 0 : i32
    %c0_i32_1 = arith.constant 0 : i32
    return %c0_i32, %c0_i32_0 : i32, i32
  }
  func.func @transform_3(%arg0: i32) -> (i32, i32) {
    %c0_i32 = arith.constant 0 : i32
    %c0_i32_0 = arith.constant 0 : i32
    %c0_i32_1 = arith.constant 0 : i32
    return %c0_i32, %c0_i32_0 : i32, i32
  }
  func.func @transform_4(%arg0: i32) -> (i32, i32) {
    %c0_i32 = arith.constant 0 : i32
    %c0_i32_0 = arith.constant 0 : i32
    %c0_i32_1 = arith.constant 0 : i32
    return %c0_i32, %c0_i32_0 : i32, i32
  }
  func.func @transform_5(%arg0: i32) -> (i32, i32) {
    %c0_i32 = arith.constant 0 : i32
    %c0_i32_0 = arith.constant 0 : i32
    %c0_i32_1 = arith.constant 0 : i32
    return %c0_i32, %c0_i32_0 : i32, i32
  }
  func.func @transform_6(%arg0: i32) -> (i32, i32) {
    %c0_i32 = arith.constant 0 : i32
    %c0_i32_0 = arith.constant 0 : i32
    %c0_i32_1 = arith.constant 0 : i32
    return %c0_i32, %c0_i32_0 : i32, i32
  }
  func.func @transform_7(%arg0: i32) -> (i32, i32) {
    %c0_i32 = arith.constant 0 : i32
    %c0_i32_0 = arith.constant 0 : i32
    %c0_i32_1 = arith.constant 0 : i32
    return %c0_i32, %c0_i32_0 : i32, i32
  }
  func.func @transform_8(%arg0: i32) -> (i32, i32) {
    %c0_i32 = arith.constant 0 : i32
    %c0_i32_0 = arith.constant 0 : i32
    %c0_i32_1 = arith.constant 0 : i32
    return %c0_i32, %c0_i32_0 : i32, i32
  }
  func.func @transform_9(%arg0: i32) -> (i32, i32) {
    %c0_i32 = arith.constant 0 : i32
    %c0_i32_0 = arith.constant 0 : i32
    %c0_i32_1 = arith.constant 0 : i32
    return %c0_i32, %c0_i32_0 : i32, i32
  }
  func.func @transform_10(%arg0: i32) -> (i32, i32) {
    %c0_i32 = arith.constant 0 : i32
    %c0_i32_0 = arith.constant 0 : i32
    %c0_i32_1 = arith.constant 0 : i32
    return %c0_i32, %c0_i32_0 : i32, i32
  }
  func.func @transform_11(%arg0: i32) -> (i32, i32) {
    %c0_i32 = arith.constant 0 : i32
    %c0_i32_0 = arith.constant 0 : i32
    %c0_i32_1 = arith.constant 0 : i32
    return %c0_i32, %c0_i32_0 : i32, i32
  }
  func.func @transform_12(%arg0: i32) -> (i32, i32) {
    %c0_i32 = arith.constant 0 : i32
    %c0_i32_0 = arith.constant 0 : i32
    %c0_i32_1 = arith.constant 0 : i32
    return %c0_i32, %c0_i32_0 : i32, i32
  }
  func.func @transform_13(%arg0: i32) -> (i32, i32) {
    %c0_i32 = arith.constant 0 : i32
    %c0_i32_0 = arith.constant 0 : i32
    return %arg0, %c0_i32 : i32, i32
  }
}

</mosaic_0001>

<llo_original>
// kernel: nn_regressor_dropout_forward.1
$region0: #{nn_regressor_dropout_forward.1}
  #allocation0 [shape = 'u32[]', space=smem, size = 0x4, offset = 0x4, fixed_abs, tag = 'smem constant byte address 0x4 - core index']
  #allocation1 [shape = 'u32[144,128]{1,0:T(1,128)}', space=vmem, size = 0x12000, scoped, tag = 'internal scratch']
  %s0 = inlined_call_operand.vmem [shape: bf16[16,128], index: 0, kind: input, shape index: {}]
  %s1 = inlined_call_operand.hbm [shape: bf16[128,512], index: 1, kind: input, shape index: {}]
  %s2 = inlined_call_operand.hbm [shape: f32[1,512], index: 2, kind: input, shape index: {}]
  %s3 = inlined_call_operand.hbm [shape: bf16[512,512], index: 3, kind: input, shape index: {}]
  %s4 = inlined_call_operand.hbm [shape: f32[1,512], index: 4, kind: input, shape index: {}]
  %s5 = inlined_call_operand.hbm [shape: bf16[512,384], index: 5, kind: input, shape index: {}]
  %s6 = inlined_call_operand.hbm [shape: f32[1,384], index: 6, kind: input, shape index: {}]
  %s7 = inlined_call_operand.hbm [shape: bf16[384,384], index: 7, kind: input, shape index: {}]
  %s8 = inlined_call_operand.hbm [shape: f32[1,384], index: 8, kind: input, shape index: {}]
  %s9 = inlined_call_operand.hbm [shape: bf16[384,128], index: 9, kind: input, shape index: {}]
  %s10 = inlined_call_operand.vmem [shape: f32[1,128], index: 10, kind: input, shape index: {}]
  %s11 = inlined_call_operand.vmem [shape: bf16[128,128], index: 11, kind: input, shape index: {}]
  %s12 = inlined_call_operand.vmem [shape: f32[1,128], index: 12, kind: input, shape index: {}]
  %s13 = inlined_call_operand.vmem [shape: f32[16,128], index: 13, kind: output, shape index: {}]
  %s14 = sld [smem:[#allocation0]]
  $region98: #{nn_regressor_dropout_forward.1} parent=0
    _
  %s16 = ssub.s32 1, %s14
  %s17 = scalar_select 0, %s16, %s14
  $region1: #{nn_regressor_dropout_forward.1} parent=0
    #allocation2 [shape = 'u8[131072]{0}', space=vmem, size = 0x20000, scoped, tag = 'input window, operand 1, single buffered']
    #allocation3 [shape = 's32[1]{0}', space=sflag, size = 0x4, scoped, tag = 'scoped memory for nn_regressor_dropout_forward.1']
    #allocation4 [shape = 'u8[2048]{0}', space=vmem, size = 0x800, scoped, tag = 'input window, operand 2, single buffered']
    #allocation5 [shape = 's32[1]{0}', space=sflag, size = 0x4, scoped, tag = 'scoped memory for nn_regressor_dropout_forward.1']
    #allocation6 [shape = 'u8[524288]{0}', space=vmem, size = 0x80000, scoped, tag = 'input window, operand 3, single buffered']
    #allocation7 [shape = 'u8[2048]{0}', space=vmem, size = 0x800, scoped, tag = 'input window, operand 4, single buffered']
    #allocation8 [shape = 's32[1]{0}', space=sflag, size = 0x4, scoped, tag = 'scoped memory for nn_regressor_dropout_forward.1']
    #allocation9 [shape = 'u8[393216]{0}', space=vmem, size = 0x60000, scoped, tag = 'input window, operand 5, single buffered']
    #allocation10 [shape = 'u8[1536]{0}', space=vmem, size = 0x800, scoped, tag = 'input window, operand 6, single buffered']
    #allocation11 [shape = 's32[1]{0}', space=sflag, size = 0x4, scoped, tag = 'scoped memory for nn_regressor_dropout_forward.1']
    #allocation12 [shape = 'u8[294912]{0}', space=vmem, size = 0x48000, scoped, tag = 'input window, operand 7, single buffered']
    #allocation13 [shape = 'u8[1536]{0}', space=vmem, size = 0x800, scoped, tag = 'input window, operand 8, single buffered']
    #allocation14 [shape = 's32[1]{0}', space=sflag, size = 0x4, scoped, tag = 'scoped memory for nn_regressor_dropout_forward.1']
    #allocation15 [shape = 'u8[98304]{0}', space=vmem, size = 0x18000, scoped, tag = 'input window, operand 9, single buffered']
    %18 = vsyncpa [#allocation3], 0
    %19 = vsyncpa [#allocation5], 0
    %20 = vsyncpa [#allocation8], 0
    %21 = vsyncpa [#allocation11], 0
    %22 = vsyncpa [#allocation14], 0
    // Predicated region
    $region2: #{nn_regressor_dropout_forward.1} parent=1 // pred_check
      _
    $region3: #{nn_regressor_dropout_forward.1} parent=1 // pred_check_branch
      %24 = sbr.rel (0) target = $region5
    $region4: #{nn_regressor_dropout_forward.1} parent=1 // pred_region
      _
    $region5: #{nn_regressor_dropout_forward.1} parent=1 // pred_fallthru
      _
    // Predicated region
    $region6: #{nn_regressor_dropout_forward.1} parent=1 // pred_check
      _
    $region7: #{nn_regressor_dropout_forward.1} parent=1 // pred_check_branch
      %26 = sbr.rel (0) target = $region9
    $region8: #{nn_regressor_dropout_forward.1} parent=1 // pred_region
      %s28 = ssub.s32 4096, 4096
      %29 = vsyncadd [#allocation3], %s28
      %s30 = sshll.u32 [#allocation2], 4
      %s31 = int_to_ptr.vmem [resolvable:$true] %s30
      %36 = dma.hbm_to_vmem [thread:$0]  %s1, 4096, %s31, [#allocation3], 256, 256, 16
    $region9: #{nn_regressor_dropout_forward.1} parent=1 // pred_fallthru
      _
    // Predicated region
    $region10: #{nn_regressor_dropout_forward.1} parent=1 // pred_check
      _
    $region11: #{nn_regressor_dropout_forward.1} parent=1 // pred_check_branch
      %38 = sbr.rel (0) target = $region13
    $region12: #{nn_regressor_dropout_forward.1} parent=1 // pred_region
      %s40 = ssub.s32 64, 64
      %41 = vsyncadd [#allocation5], %s40
      %s43 = sshll.u32 [#allocation4], 4
      %s44 = int_to_ptr.vmem [resolvable:$true] %s43
      %46 = dma.hbm_to_vmem [thread:$0]  %s2, 64, %s44, [#allocation5]
    $region13: #{nn_regressor_dropout_forward.1} parent=1 // pred_fallthru
      _
    // Predicated region
    $region14: #{nn_regressor_dropout_forward.1} parent=1 // pred_check
      _
    $region15: #{nn_regressor_dropout_forward.1} parent=1 // pred_check_branch
      %48 = sbr.rel (0) target = $region17
    $region16: #{nn_regressor_dropout_forward.1} parent=1 // pred_region
      %s50 = ssub.s32 16384, 16384
      %51 = vsyncadd [#allocation5], %s50
      %s52 = sshll.u32 [#allocation6], 4
      %s53 = int_to_ptr.vmem [resolvable:$true] %s52
      %58 = dma.hbm_to_vmem [thread:$0]  %s3, 16384, %s53, [#allocation5], 256, 256, 16
    $region17: #{nn_regressor_dropout_forward.1} parent=1 // pred_fallthru
      _
    // Predicated region
    $region18: #{nn_regressor_dropout_forward.1} parent=1 // pred_check
      _
    $region19: #{nn_regressor_dropout_forward.1} parent=1 // pred_check_branch
      %60 = sbr.rel (0) target = $region21
    $region20: #{nn_regressor_dropout_forward.1} parent=1 // pred_region
      %s62 = ssub.s32 64, 64
      %63 = vsyncadd [#allocation8], %s62
      %s65 = sshll.u32 [#allocation7], 4
      %s66 = int_to_ptr.vmem [resolvable:$true] %s65
      %68 = dma.hbm_to_vmem [thread:$0]  %s4, 64, %s66, [#allocation8]
    $region21: #{nn_regressor_dropout_forward.1} parent=1 // pred_fallthru
      _
    // Predicated region
    $region22: #{nn_regressor_dropout_forward.1} parent=1 // pred_check
      _
    $region23: #{nn_regressor_dropout_forward.1} parent=1 // pred_check_branch
      %70 = sbr.rel (0) target = $region25
    $region24: #{nn_regressor_dropout_forward.1} parent=1 // pred_region
      %s72 = ssub.s32 12288, 12288
      %73 = vsyncadd [#allocation8], %s72
      %s74 = sshll.u32 [#allocation9], 4
      %s75 = int_to_ptr.vmem [resolvable:$true] %s74
      %80 = dma.hbm_to_vmem [thread:$0]  %s5, 12288, %s75, [#allocation8], 192, 192, 12
    $region25: #{nn_regressor_dropout_forward.1} parent=1 // pred_fallthru
      _
    // Predicated region
    $region26: #{nn_regressor_dropout_forward.1} parent=1 // pred_check
      _
    $region27: #{nn_regressor_dropout_forward.1} parent=1 // pred_check_branch
      %82 = sbr.rel (0) target = $region29
    $region28: #{nn_regressor_dropout_forward.1} parent=1 // pred_region
      %s84 = ssub.s32 48, 48
      %85 = vsyncadd [#allocation11], %s84
      %s87 = sshll.u32 [#allocation10], 4
      %s88 = int_to_ptr.vmem [resolvable:$true] %s87
      %90 = dma.hbm_to_vmem [thread:$0]  %s6, 48, %s88, [#allocation11]
    $region29: #{nn_regressor_dropout_forward.1} parent=1 // pred_fallthru
      _
    // Predicated region
    $region30: #{nn_regressor_dropout_forward.1} parent=1 // pred_check
      _
    $region31: #{nn_regressor_dropout_forward.1} parent=1 // pred_check_branch
      %92 = sbr.rel (0) target = $region33
    $region32: #{nn_regressor_dropout_forward.1} parent=1 // pred_region
      %s94 = ssub.s32 9216, 9216
      %95 = vsyncadd [#allocation11], %s94
      %s96 = sshll.u32 [#allocation12], 4
      %s97 = int_to_ptr.vmem [resolvable:$true] %s96
      %102 = dma.hbm_to_vmem [thread:$0]  %s7, 9216, %s97, [#allocation11], 192, 192, 12
    $region33: #{nn_regressor_dropout_forward.1} parent=1 // pred_fallthru
      _
    // Predicated region
    $region34: #{nn_regressor_dropout_forward.1} parent=1 // pred_check
      _
    $region35: #{nn_regressor_dropout_forward.1} parent=1 // pred_check_branch
      %104 = sbr.rel (0) target = $region37
    $region36: #{nn_regressor_dropout_forward.1} parent=1 // pred_region
      %s106 = ssub.s32 48, 48
      %107 = vsyncadd [#allocation14], %s106
      %s109 = sshll.u32 [#allocation13], 4
      %s110 = int_to_ptr.vmem [resolvable:$true] %s109
      %112 = dma.hbm_to_vmem [thread:$0]  %s8, 48, %s110, [#allocation14]
    $region37: #{nn_regressor_dropout_forward.1} parent=1 // pred_fallthru
      _
    // Predicated region
    $region38: #{nn_regressor_dropout_forward.1} parent=1 // pred_check
      _
    $region39: #{nn_regressor_dropout_forward.1} parent=1 // pred_check_branch
      %114 = sbr.rel (0) target = $region41
    $region40: #{nn_regressor_dropout_forward.1} parent=1 // pred_region
      %s116 = ssub.s32 3072, 3072
      %117 = vsyncadd [#allocation14], %s116
      %s118 = sshll.u32 [#allocation15], 4
      %s119 = int_to_ptr.vmem [resolvable:$true] %s118
      %124 = dma.hbm_to_vmem [thread:$0]  %s9, 3072, %s119, [#allocation14], 64, 64, 4
    $region41: #{nn_regressor_dropout_forward.1} parent=1 // pred_fallthru
      _
    // Predicated region
    $region42: #{nn_regressor_dropout_forward.1} parent=1 // pred_check
      _
    $region43: #{nn_regressor_dropout_forward.1} parent=1 // pred_check_branch
      %126 = sbr.rel (0) target = $region45
    $region44: #{nn_regressor_dropout_forward.1} parent=1 // pred_region
      _
    $region45: #{nn_regressor_dropout_forward.1} parent=1 // pred_fallthru
      _
    // Predicated region
    $region46: #{nn_regressor_dropout_forward.1} parent=1 // pred_check
      _
    $region47: #{nn_regressor_dropout_forward.1} parent=1 // pred_check_branch
      %128 = sbr.rel (0) target = $region49
    $region48: #{nn_regressor_dropout_forward.1} parent=1 // pred_region
      _
    $region49: #{nn_regressor_dropout_forward.1} parent=1 // pred_fallthru
      _
    // Predicated region
    $region50: #{nn_regressor_dropout_forward.1} parent=1 // pred_check
      _
    $region51: #{nn_regressor_dropout_forward.1} parent=1 // pred_check_branch
      %130 = sbr.rel (0) target = $region53
    $region52: #{nn_regressor_dropout_forward.1} parent=1 // pred_region
      _
    $region53: #{nn_regressor_dropout_forward.1} parent=1 // pred_fallthru
      _
    // Predicated region
    $region54: #{nn_regressor_dropout_forward.1} parent=1 // pred_check
      _
    $region55: #{nn_regressor_dropout_forward.1} parent=1 // pred_check_branch
      %132 = sbr.rel (0) target = $region57
    $region56: #{nn_regressor_dropout_forward.1} parent=1 // pred_region
      %133 = dma.done [#allocation3], 4096
    $region57: #{nn_regressor_dropout_forward.1} parent=1 // pred_fallthru
      _
    // Predicated region
    $region58: #{nn_regressor_dropout_forward.1} parent=1 // pred_check
      _
    $region59: #{nn_regressor_dropout_forward.1} parent=1 // pred_check_branch
      %135 = sbr.rel (0) target = $region61
    $region60: #{nn_regressor_dropout_forward.1} parent=1 // pred_region
      %136 = dma.done [#allocation5], 64
    $region61: #{nn_regressor_dropout_forward.1} parent=1 // pred_fallthru
      _
    // Predicated region
    $region62: #{nn_regressor_dropout_forward.1} parent=1 // pred_check
      _
    $region63: #{nn_regressor_dropout_forward.1} parent=1 // pred_check_branch
      %138 = sbr.rel (0) target = $region65
    $region64: #{nn_regressor_dropout_forward.1} parent=1 // pred_region
      %139 = dma.done [#allocation5], 16384
    $region65: #{nn_regressor_dropout_forward.1} parent=1 // pred_fallthru
      _
    // Predicated region
    $region66: #{nn_regressor_dropout_forward.1} parent=1 // pred_check
      _
    $region67: #{nn_regressor_dropout_forward.1} parent=1 // pred_check_branch
      %141 = sbr.rel (0) target = $region69
    $region68: #{nn_regressor_dropout_forward.1} parent=1 // pred_region
      %142 = dma.done [#allocation8], 64
    $region69: #{nn_regressor_dropout_forward.1} parent=1 // pred_fallthru
      _
    // Predicated region
    $region70: #{nn_regressor_dropout_forward.1} parent=1 // pred_check
      _
    $region71: #{nn_regressor_dropout_forward.1} parent=1 // pred_check_branch
      %144 = sbr.rel (0) target = $region73
    $region72: #{nn_regressor_dropout_forward.1} parent=1 // pred_region
      %145 = dma.done [#allocation8], 12288
    $region73: #{nn_regressor_dropout_forward.1} parent=1 // pred_fallthru
      _
    // Predicated region
    $region74: #{nn_regressor_dropout_forward.1} parent=1 // pred_check
      _
    $region75: #{nn_regressor_dropout_forward.1} parent=1 // pred_check_branch
      %147 = sbr.rel (0) target = $region77
    $region76: #{nn_regressor_dropout_forward.1} parent=1 // pred_region
      %148 = dma.done [#allocation11], 48
    $region77: #{nn_regressor_dropout_forward.1} parent=1 // pred_fallthru
      _
    // Predicated region
    $region78: #{nn_regressor_dropout_forward.1} parent=1 // pred_check
      _
    $region79: #{nn_regressor_dropout_forward.1} parent=1 // pred_check_branch
      %150 = sbr.rel (0) target = $region81
    $region80: #{nn_regressor_dropout_forward.1} parent=1 // pred_region
      %151 = dma.done [#allocation11], 9216
    $region81: #{nn_regressor_dropout_forward.1} parent=1 // pred_fallthru
      _
    // Predicated region
    $region82: #{nn_regressor_dropout_forward.1} parent=1 // pred_check
      _
    $region83: #{nn_regressor_dropout_forward.1} parent=1 // pred_check_branch
      %153 = sbr.rel (0) target = $region85
    $region84: #{nn_regressor_dropout_forward.1} parent=1 // pred_region
      %154 = dma.done [#allocation14], 48
    $region85: #{nn_regressor_dropout_forward.1} parent=1 // pred_fallthru
      _
    // Predicated region
    $region86: #{nn_regressor_dropout_forward.1} parent=1 // pred_check
      _
    $region87: #{nn_regressor_dropout_forward.1} parent=1 // pred_check_branch
      %156 = sbr.rel (0) target = $region89
    $region88: #{nn_regressor_dropout_forward.1} parent=1 // pred_region
      %157 = dma.done [#allocation14], 3072
    $region89: #{nn_regressor_dropout_forward.1} parent=1 // pred_fallthru
      _
    %v159 = vld [vmem:[%s0] sm:$0xf]
    %v160 = vld [vmem:[%s0 + $0x4] sm:$0xf]
    %v161 = vld [vmem:[#allocation2] sm:$0xff]
    %v162 = vld [vmem:[#allocation2 + $0x8] sm:$0xff]
    %v163 = vld [vmem:[#allocation2 + $0x10] sm:$0xff]
    %v164 = vld [vmem:[#allocation2 + $0x18] sm:$0xff]
    %v165 = vld [vmem:[#allocation2 + $0x20] sm:$0xff]
    %v166 = vld [vmem:[#allocation2 + $0x28] sm:$0xff]
    %v167 = vld [vmem:[#allocation2 + $0x30] sm:$0xff]
    %v168 = vld [vmem:[#allocation2 + $0x38] sm:$0xff]
    %v169 = vld [vmem:[#allocation2 + $0x40] sm:$0xff]
    %v170 = vld [vmem:[#allocation2 + $0x48] sm:$0xff]
    %v171 = vld [vmem:[#allocation2 + $0x50] sm:$0xff]
    %v172 = vld [vmem:[#allocation2 + $0x58] sm:$0xff]
    %v173 = vld [vmem:[#allocation2 + $0x60] sm:$0xff]
    %v174 = vld [vmem:[#allocation2 + $0x68] sm:$0xff]
    %v175 = vld [vmem:[#allocation2 + $0x70] sm:$0xff]
    %v176 = vld [vmem:[#allocation2 + $0x78] sm:$0xff]
    %v177 = vld [vmem:[#allocation2 + $0x80] sm:$0xff]
    %v178 = vld [vmem:[#allocation2 + $0x88] sm:$0xff]
    %v179 = vld [vmem:[#allocation2 + $0x90] sm:$0xff]
    %v180 = vld [vmem:[#allocation2 + $0x98] sm:$0xff]
    %v181 = vld [vmem:[#allocation2 + $0xa0] sm:$0xff]
    %v182 = vld [vmem:[#allocation2 + $0xa8] sm:$0xff]
    %v183 = vld [vmem:[#allocation2 + $0xb0] sm:$0xff]
    %v184 = vld [vmem:[#allocation2 + $0xb8] sm:$0xff]
    %v185 = vld [vmem:[#allocation2 + $0xc0] sm:$0xff]
    %v186 = vld [vmem:[#allocation2 + $0xc8] sm:$0xff]
    %v187 = vld [vmem:[#allocation2 + $0xd0] sm:$0xff]
    %v188 = vld [vmem:[#allocation2 + $0xd8] sm:$0xff]
    %v189 = vld [vmem:[#allocation2 + $0xe0] sm:$0xff]
    %v190 = vld [vmem:[#allocation2 + $0xe8] sm:$0xff]
    %v191 = vld [vmem:[#allocation2 + $0xf0] sm:$0xff]
    %v192 = vld [vmem:[#allocation2 + $0xf8] sm:$0xff]
    %v193 = vld [vmem:[#allocation4] sm:$0xf]
    %v195 = vlaneseq
    %v196 = vshrl.u32 %v195, 7
    %v197 = vsub.s32 0, %v196
    %v198 = vrot.slane %v193, %v197
    %v199 = vlaneseq
    %v200 = vshrl.u32 %v199, 7
    %v201 = vsub.s32 1, %v200
    %v202 = vrot.slane %v193, %v201
    %v203 = vlaneseq
    %v204 = vshrl.u32 %v203, 7
    %v205 = vsub.s32 2, %v204
    %v206 = vrot.slane %v193, %v205
    %v207 = vlaneseq
    %v208 = vshrl.u32 %v207, 7
    %v209 = vsub.s32 3, %v208
    %v210 = vrot.slane %v193, %v209
    %v217 = vunpack.c.l.b16 %v159
    %v218 = vunpack.c.l.b16 %v160
    %v219 = vpack.c.b16 %v218, %v217
    %v253 = vunpack.c.l.b16 %v161
    %v254 = vunpack.c.h.b16 %v161
    %v255 = vunpack.c.l.b16 %v162
    %v256 = vunpack.c.h.b16 %v162
    %v257 = vunpack.c.l.b16 %v163
    %v258 = vunpack.c.h.b16 %v163
    %v259 = vunpack.c.l.b16 %v164
    %v260 = vunpack.c.h.b16 %v164
    %v261 = vunpack.c.l.b16 %v165
    %v262 = vunpack.c.h.b16 %v165
    %v263 = vunpack.c.l.b16 %v166
    %v264 = vunpack.c.h.b16 %v166
    %v265 = vunpack.c.l.b16 %v167
    %v266 = vunpack.c.h.b16 %v167
    %v267 = vunpack.c.l.b16 %v168
    %v268 = vunpack.c.h.b16 %v168
    %v269 = vunpack.c.l.b16 %v169
    %v270 = vunpack.c.h.b16 %v169
    %v271 = vunpack.c.l.b16 %v170
    %v272 = vunpack.c.h.b16 %v170
    %v273 = vunpack.c.l.b16 %v171
    %v274 = vunpack.c.h.b16 %v171
    %v275 = vunpack.c.l.b16 %v172
    %v276 = vunpack.c.h.b16 %v172
    %v277 = vunpack.c.l.b16 %v173
    %v278 = vunpack.c.h.b16 %v173
    %v279 = vunpack.c.l.b16 %v174
    %v280 = vunpack.c.h.b16 %v174
    %v281 = vunpack.c.l.b16 %v175
    %v282 = vunpack.c.h.b16 %v175
    %v283 = vunpack.c.l.b16 %v176
    %v284 = vunpack.c.h.b16 %v176
    %v285 = vunpack.c.l.b16 %v177
    %v286 = vunpack.c.h.b16 %v177
    %v287 = vunpack.c.l.b16 %v178
    %v288 = vunpack.c.h.b16 %v178
    %v289 = vunpack.c.l.b16 %v179
    %v290 = vunpack.c.h.b16 %v179
    %v291 = vunpack.c.l.b16 %v180
    %v292 = vunpack.c.h.b16 %v180
    %v293 = vunpack.c.l.b16 %v181
    %v294 = vunpack.c.h.b16 %v181
    %v295 = vunpack.c.l.b16 %v182
    %v296 = vunpack.c.h.b16 %v182
    %v297 = vunpack.c.l.b16 %v183
    %v298 = vunpack.c.h.b16 %v183
    %v299 = vunpack.c.l.b16 %v184
    %v300 = vunpack.c.h.b16 %v184
    %v301 = vunpack.c.l.b16 %v185
    %v302 = vunpack.c.h.b16 %v185
    %v303 = vunpack.c.l.b16 %v186
    %v304 = vunpack.c.h.b16 %v186
    %v305 = vunpack.c.l.b16 %v187
    %v306 = vunpack.c.h.b16 %v187
    %v307 = vunpack.c.l.b16 %v188
    %v308 = vunpack.c.h.b16 %v188
    %v309 = vunpack.c.l.b16 %v189
    %v310 = vunpack.c.h.b16 %v189
    %v311 = vunpack.c.l.b16 %v190
    %v312 = vunpack.c.h.b16 %v190
    %v313 = vunpack.c.l.b16 %v191
    %v314 = vunpack.c.h.b16 %v191
    %v315 = vunpack.c.l.b16 %v192
    %v316 = vunpack.c.h.b16 %v192
    %v317 = vpack.c.b16 %v257, %v253
    %v318 = vpack.c.b16 %v258, %v254
    %v319 = vpack.c.b16 %v259, %v255
    %v320 = vpack.c.b16 %v260, %v256
    %v321 = vpack.c.b16 %v265, %v261
    %v322 = vpack.c.b16 %v266, %v262
    %v323 = vpack.c.b16 %v267, %v263
    %v324 = vpack.c.b16 %v268, %v264
    %v325 = vpack.c.b16 %v273, %v269
    %v326 = vpack.c.b16 %v274, %v270
    %v327 = vpack.c.b16 %v275, %v271
    %v328 = vpack.c.b16 %v276, %v272
    %v329 = vpack.c.b16 %v281, %v277
    %v330 = vpack.c.b16 %v282, %v278
    %v331 = vpack.c.b16 %v283, %v279
    %v332 = vpack.c.b16 %v284, %v280
    %v333 = vpack.c.b16 %v289, %v285
    %v334 = vpack.c.b16 %v290, %v286
    %v335 = vpack.c.b16 %v291, %v287
    %v336 = vpack.c.b16 %v292, %v288
    %v337 = vpack.c.b16 %v297, %v293
    %v338 = vpack.c.b16 %v298, %v294
    %v339 = vpack.c.b16 %v299, %v295
    %v340 = vpack.c.b16 %v300, %v296
    %v341 = vpack.c.b16 %v305, %v301
    %v342 = vpack.c.b16 %v306, %v302
    %v343 = vpack.c.b16 %v307, %v303
    %v344 = vpack.c.b16 %v308, %v304
    %v345 = vpack.c.b16 %v313, %v309
    %v346 = vpack.c.b16 %v314, %v310
    %v347 = vpack.c.b16 %v315, %v311
    %v348 = vpack.c.b16 %v316, %v312
    %381 = vmatprep.subr.bf16.mxu0 %v318
    %382 = vmatpush1.bf16.msra.mxu0 %v317
    %383 = vmatprep.subr.bf16.mxu0 %v322
    %384 = vmatpush1.bf16.msra.mxu0 %v321
    %385 = vmatprep.subr.bf16.mxu0 %v326
    %386 = vmatpush1.bf16.msra.mxu0 %v325
    %387 = vmatprep.subr.bf16.mxu0 %v330
    %388 = vmatpush1.bf16.msra.mxu0 %v329
    %389 = vmatprep.subr.bf16.mxu0 %v334
    %390 = vmatpush1.bf16.msra.mxu0 %v333
    %391 = vmatprep.subr.bf16.mxu0 %v338
    %392 = vmatpush1.bf16.msra.mxu0 %v337
    %393 = vmatprep.subr.bf16.mxu0 %v342
    %394 = vmatpush1.bf16.msra.mxu0 %v341
    %395 = vmatprep.subr.bf16.mxu0 %v346
    %396 = vmatpush1.bf16.msra.mxu0 %v345
    %397 = vmatprep.subr.bf16.mxu0 0
    %398 = vmatpush1.bf16.msra.mxu0 0
    %399 = vmatprep.subr.bf16.mxu0 0
    %400 = vmatpush1.bf16.msra.mxu0 0
    %401 = vmatprep.subr.bf16.mxu0 0
    %402 = vmatpush1.bf16.msra.mxu0 0
    %403 = vmatprep.subr.bf16.mxu0 0
    %404 = vmatpush1.bf16.msra.mxu0 0
    %405 = vmatprep.subr.bf16.mxu0 0
    %406 = vmatpush1.bf16.msra.mxu0 0
    %407 = vmatprep.subr.bf16.mxu0 0
    %408 = vmatpush1.bf16.msra.mxu0 0
    %409 = vmatprep.subr.bf16.mxu0 0
    %410 = vmatpush1.bf16.msra.mxu0 0
    %411 = vmatprep.subr.bf16.mxu0 0
    %412 = vmatpush1.bf16.msra.mxu0 0
    %413 = vmatprep.mubr.bf16.mxu0 0
    %414 = vmatmul.mubr.bf16.gmra.mrb[0].mxu0 %v219
    %v415 = vpop.f32.mrb[0].mxu0
    %v416 = vadd.f32 %v198, %v415
    %v417 = vpop.f32.mrb[0].mxu0
    %v418 = vadd.f32 %v202, %v417
    %v419 = vpop.f32.mrb[0].mxu0
    %v420 = vadd.f32 %v198, %v419
    %v421 = vpop.f32.mrb[0].mxu0
    %v422 = vadd.f32 %v202, %v421
    %423 = vdwg.mxu0
    %424 = vmatprep.subr.bf16.mxu0 %v320
    %425 = vmatpush1.bf16.msra.mxu0 %v319
    %426 = vmatprep.subr.bf16.mxu0 %v324
    %427 = vmatpush1.bf16.msra.mxu0 %v323
    %428 = vmatprep.subr.bf16.mxu0 %v328
    %429 = vmatpush1.bf16.msra.mxu0 %v327
    %430 = vmatprep.subr.bf16.mxu0 %v332
    %431 = vmatpush1.bf16.msra.mxu0 %v331
    %432 = vmatprep.subr.bf16.mxu0 %v336
    %433 = vmatpush1.bf16.msra.mxu0 %v335
    %434 = vmatprep.subr.bf16.mxu0 %v340
    %435 = vmatpush1.bf16.msra.mxu0 %v339
    %436 = vmatprep.subr.bf16.mxu0 %v344
    %437 = vmatpush1.bf16.msra.mxu0 %v343
    %438 = vmatprep.subr.bf16.mxu0 %v348
    %439 = vmatpush1.bf16.msra.mxu0 %v347
    %440 = vmatprep.subr.bf16.mxu0 0
    %441 = vmatpush1.bf16.msra.mxu0 0
    %442 = vmatprep.subr.bf16.mxu0 0
    %443 = vmatpush1.bf16.msra.mxu0 0
    %444 = vmatprep.subr.bf16.mxu0 0
    %445 = vmatpush1.bf16.msra.mxu0 0
    %446 = vmatprep.subr.bf16.mxu0 0
    %447 = vmatpush1.bf16.msra.mxu0 0
    %448 = vmatprep.subr.bf16.mxu0 0
    %449 = vmatpush1.bf16.msra.mxu0 0
    %450 = vmatprep.subr.bf16.mxu0 0
    %451 = vmatpush1.bf16.msra.mxu0 0
    %452 = vmatprep.subr.bf16.mxu0 0
    %453 = vmatpush1.bf16.msra.mxu0 0
    %454 = vmatprep.subr.bf16.mxu0 0
    %455 = vmatpush1.bf16.msra.mxu0 0
    %456 = vmatprep.mubr.bf16.mxu0 0
    %457 = vmatmul.mubr.bf16.gmra.mrb[0].mxu0 %v219
    %v458 = vpop.f32.mrb[0].mxu0
    %v459 = vadd.f32 %v206, %v458
    %v460 = vpop.f32.mrb[0].mxu0
    %v461 = vadd.f32 %v210, %v460
    %v462 = vpop.f32.mrb[0].mxu0
    %v463 = vadd.f32 %v206, %v462
    %v464 = vpop.f32.mrb[0].mxu0
    %v465 = vadd.f32 %v210, %v464
    %466 = vdwg.mxu0
    %vm467 = vcmp.ge.f32.partialorder %v416, 0.0
    %vm468 = vcmp.ge.f32.partialorder %v418, 0.0
    %vm469 = vcmp.ge.f32.partialorder %v459, 0.0
    %vm470 = vcmp.ge.f32.partialorder %v461, 0.0
    %vm471 = vcmp.ge.f32.partialorder %v420, 0.0
    %vm472 = vcmp.ge.f32.partialorder %v422, 0.0
    %vm473 = vcmp.ge.f32.partialorder %v463, 0.0
    %vm474 = vcmp.ge.f32.partialorder %v465, 0.0
    %v475 = vmul.f32 %v416, 0.22916667
    %v476 = vmul.f32 %v418, 0.22916667
    %v477 = vmul.f32 %v459, 0.22916667
    %v478 = vmul.f32 %v461, 0.22916667
    %v479 = vmul.f32 %v420, 0.22916667
    %v480 = vmul.f32 %v422, 0.22916667
    %v481 = vmul.f32 %v463, 0.22916667
    %v482 = vmul.f32 %v465, 0.22916667
    %v483 = vsel %vm467, %v416, %v475
    %v484 = vsel %vm468, %v418, %v476
    %v485 = vsel %vm469, %v459, %v477
    %v486 = vsel %vm470, %v461, %v478
    %v487 = vsel %vm471, %v420, %v479
    %v488 = vsel %vm472, %v422, %v480
    %v489 = vsel %vm473, %v463, %v481
    %v490 = vsel %vm474, %v465, %v482
    %v491 = vpack.c.bf16 %v487, %v483
    %v492 = vpack.c.bf16 %v488, %v484
    %v493 = vpack.c.bf16 %v489, %v485
    %v494 = vpack.c.bf16 %v490, %v486
    %v495 = vld [vmem:[#allocation6] sm:$0xff]
    %v496 = vld [vmem:[#allocation6 + $0x8] sm:$0xff]
    %v497 = vld [vmem:[#allocation6 + $0x10] sm:$0xff]
    %v498 = vld [vmem:[#allocation6 + $0x18] sm:$0xff]
    %v499 = vld [vmem:[#allocation6 + $0x20] sm:$0xff]
    %v500 = vld [vmem:[#allocation6 + $0x28] sm:$0xff]
    %v501 = vld [vmem:[#allocation6 + $0x30] sm:$0xff]
    %v502 = vld [vmem:[#allocation6 + $0x38] sm:$0xff]
    %v503 = vld [vmem:[#allocation6 + $0x40] sm:$0xff]
    %v504 = vld [vmem:[#allocation6 + $0x48] sm:$0xff]
    %v505 = vld [vmem:[#allocation6 + $0x50] sm:$0xff]
    %v506 = vld [vmem:[#allocation6 + $0x58] sm:$0xff]
    %v507 = vld [vmem:[#allocation6 + $0x60] sm:$0xff]
    %v508 = vld [vmem:[#allocation6 + $0x68] sm:$0xff]
    %v509 = vld [vmem:[#allocation6 + $0x70] sm:$0xff]
    %v510 = vld [vmem:[#allocation6 + $0x78] sm:$0xff]
    %v511 = vld [vmem:[#allocation6 + $0x80] sm:$0xff]
    %v512 = vld [vmem:[#allocation6 + $0x88] sm:$0xff]
    %v513 = vld [vmem:[#allocation6 + $0x90] sm:$0xff]
    %v514 = vld [vmem:[#allocation6 + $0x98] sm:$0xff]
    %v515 = vld [vmem:[#allocation6 + $0xa0] sm:$0xff]
    %v516 = vld [vmem:[#allocation6 + $0xa8] sm:$0xff]
    %v517 = vld [vmem:[#allocation6 + $0xb0] sm:$0xff]
    %v518 = vld [vmem:[#allocation6 + $0xb8] sm:$0xff]
    %v519 = vld [vmem:[#allocation6 + $0xc0] sm:$0xff]
    %v520 = vld [vmem:[#allocation6 + $0xc8] sm:$0xff]
    %v521 = vld [vmem:[#allocation6 + $0xd0] sm:$0xff]
    %v522 = vld [vmem:[#allocation6 + $0xd8] sm:$0xff]
    %v523 = vld [vmem:[#allocation6 + $0xe0] sm:$0xff]
    %v524 = vld [vmem:[#allocation6 + $0xe8] sm:$0xff]
    %v525 = vld [vmem:[#allocation6 + $0xf0] sm:$0xff]
    %v526 = vld [vmem:[#allocation6 + $0xf8] sm:$0xff]
    %v527 = vld [vmem:[#allocation6 + $0x100] sm:$0xff]
    %v528 = vld [vmem:[#allocation6 + $0x108] sm:$0xff]
    %v529 = vld [vmem:[#allocation6 + $0x110] sm:$0xff]
    %v530 = vld [vmem:[#allocation6 + $0x118] sm:$0xff]
    %v531 = vld [vmem:[#allocation6 + $0x120] sm:$0xff]
    %v532 = vld [vmem:[#allocation6 + $0x128] sm:$0xff]
    %v533 = vld [vmem:[#allocation6 + $0x130] sm:$0xff]
    %v534 = vld [vmem:[#allocation6 + $0x138] sm:$0xff]
    %v535 = vld [vmem:[#allocation6 + $0x140] sm:$0xff]
    %v536 = vld [vmem:[#allocation6 + $0x148] sm:$0xff]
    %v537 = vld [vmem:[#allocation6 + $0x150] sm:$0xff]
    %v538 = vld [vmem:[#allocation6 + $0x158] sm:$0xff]
    %v539 = vld [vmem:[#allocation6 + $0x160] sm:$0xff]
    %v540 = vld [vmem:[#allocation6 + $0x168] sm:$0xff]
    %v541 = vld [vmem:[#allocation6 + $0x170] sm:$0xff]
    %v542 = vld [vmem:[#allocation6 + $0x178] sm:$0xff]
    %v543 = vld [vmem:[#allocation6 + $0x180] sm:$0xff]
    %v544 = vld [vmem:[#allocation6 + $0x188] sm:$0xff]
    %v545 = vld [vmem:[#allocation6 + $0x190] sm:$0xff]
    %v546 = vld [vmem:[#allocation6 + $0x198] sm:$0xff]
    %v547 = vld [vmem:[#allocation6 + $0x1a0] sm:$0xff]
    %v548 = vld [vmem:[#allocation6 + $0x1a8] sm:$0xff]
    %v549 = vld [vmem:[#allocation6 + $0x1b0] sm:$0xff]
    %v550 = vld [vmem:[#allocation6 + $0x1b8] sm:$0xff]
    %v551 = vld [vmem:[#allocation6 + $0x1c0] sm:$0xff]
    %v552 = vld [vmem:[#allocation6 + $0x1c8] sm:$0xff]
    %v553 = vld [vmem:[#allocation6 + $0x1d0] sm:$0xff]
    %v554 = vld [vmem:[#allocation6 + $0x1d8] sm:$0xff]
    %v555 = vld [vmem:[#allocation6 + $0x1e0] sm:$0xff]
    %v556 = vld [vmem:[#allocation6 + $0x1e8] sm:$0xff]
    %v557 = vld [vmem:[#allocation6 + $0x1f0] sm:$0xff]
    %v558 = vld [vmem:[#allocation6 + $0x1f8] sm:$0xff]
    %v559 = vld [vmem:[#allocation6 + $0x200] sm:$0xff]
    %v560 = vld [vmem:[#allocation6 + $0x208] sm:$0xff]
    %v561 = vld [vmem:[#allocation6 + $0x210] sm:$0xff]
    %v562 = vld [vmem:[#allocation6 + $0x218] sm:$0xff]
    %v563 = vld [vmem:[#allocation6 + $0x220] sm:$0xff]
    %v564 = vld [vmem:[#allocation6 + $0x228] sm:$0xff]
    %v565 = vld [vmem:[#allocation6 + $0x230] sm:$0xff]
    %v566 = vld [vmem:[#allocation6 + $0x238] sm:$0xff]
    %v567 = vld [vmem:[#allocation6 + $0x240] sm:$0xff]
    %v568 = vld [vmem:[#allocation6 + $0x248] sm:$0xff]
    %v569 = vld [vmem:[#allocation6 + $0x250] sm:$0xff]
    %v570 = vld [vmem:[#allocation6 + $0x258] sm:$0xff]
    %v571 = vld [vmem:[#allocation6 + $0x260] sm:$0xff]
    %v572 = vld [vmem:[#allocation6 + $0x268] sm:$0xff]
    %v573 = vld [vmem:[#allocation6 + $0x270] sm:$0xff]
    %v574 = vld [vmem:[#allocation6 + $0x278] sm:$0xff]
    %v575 = vld [vmem:[#allocation6 + $0x280] sm:$0xff]
    %v576 = vld [vmem:[#allocation6 + $0x288] sm:$0xff]
    %v577 = vld [vmem:[#allocation6 + $0x290] sm:$0xff]
    %v578 = vld [vmem:[#allocation6 + $0x298] sm:$0xff]
    %v579 = vld [vmem:[#allocation6 + $0x2a0] sm:$0xff]
    %v580 = vld [vmem:[#allocation6 + $0x2a8] sm:$0xff]
    %v581 = vld [vmem:[#allocation6 + $0x2b0] sm:$0xff]
    %v582 = vld [vmem:[#allocation6 + $0x2b8] sm:$0xff]
    %v583 = vld [vmem:[#allocation6 + $0x2c0] sm:$0xff]
    %v584 = vld [vmem:[#allocation6 + $0x2c8] sm:$0xff]
    %v585 = vld [vmem:[#allocation6 + $0x2d0] sm:$0xff]
    %v586 = vld [vmem:[#allocation6 + $0x2d8] sm:$0xff]
    %v587 = vld [vmem:[#allocation6 + $0x2e0] sm:$0xff]
    %v588 = vld [vmem:[#allocation6 + $0x2e8] sm:$0xff]
    %v589 = vld [vmem:[#allocation6 + $0x2f0] sm:$0xff]
    %v590 = vld [vmem:[#allocation6 + $0x2f8] sm:$0xff]
    %v591 = vld [vmem:[#allocation6 + $0x300] sm:$0xff]
    %v592 = vld [vmem:[#allocation6 + $0x308] sm:$0xff]
    %v593 = vld [vmem:[#allocation6 + $0x310] sm:$0xff]
    %v594 = vld [vmem:[#allocation6 + $0x318] sm:$0xff]
    %v595 = vld [vmem:[#allocation6 + $0x320] sm:$0xff]
    %v596 = vld [vmem:[#allocation6 + $0x328] sm:$0xff]
    %v597 = vld [vmem:[#allocation6 + $0x330] sm:$0xff]
    %v598 = vld [vmem:[#allocation6 + $0x338] sm:$0xff]
    %v599 = vld [vmem:[#allocation6 + $0x340] sm:$0xff]
    %v600 = vld [vmem:[#allocation6 + $0x348] sm:$0xff]
    %v601 = vld [vmem:[#allocation6 + $0x350] sm:$0xff]
    %v602 = vld [vmem:[#allocation6 + $0x358] sm:$0xff]
    %v603 = vld [vmem:[#allocation6 + $0x360] sm:$0xff]
    %v604 = vld [vmem:[#allocation6 + $0x368] sm:$0xff]
    %v605 = vld [vmem:[#allocation6 + $0x370] sm:$0xff]
    %v606 = vld [vmem:[#allocation6 + $0x378] sm:$0xff]
    %v607 = vld [vmem:[#allocation6 + $0x380] sm:$0xff]
    %v608 = vld [vmem:[#allocation6 + $0x388] sm:$0xff]
    %v609 = vld [vmem:[#allocation6 + $0x390] sm:$0xff]
    %v610 = vld [vmem:[#allocation6 + $0x398] sm:$0xff]
    %v611 = vld [vmem:[#allocation6 + $0x3a0] sm:$0xff]
    %v612 = vld [vmem:[#allocation6 + $0x3a8] sm:$0xff]
    %v613 = vld [vmem:[#allocation6 + $0x3b0] sm:$0xff]
    %v614 = vld [vmem:[#allocation6 + $0x3b8] sm:$0xff]
    %v615 = vld [vmem:[#allocation6 + $0x3c0] sm:$0xff]
    %v616 = vld [vmem:[#allocation6 + $0x3c8] sm:$0xff]
    %v617 = vld [vmem:[#allocation6 + $0x3d0] sm:$0xff]
    %v618 = vld [vmem:[#allocation6 + $0x3d8] sm:$0xff]
    %v619 = vld [vmem:[#allocation6 + $0x3e0] sm:$0xff]
    %v620 = vld [vmem:[#allocation6 + $0x3e8] sm:$0xff]
    %v621 = vld [vmem:[#allocation6 + $0x3f0] sm:$0xff]
    %v622 = vld [vmem:[#allocation6 + $0x3f8] sm:$0xff]
    %v623 = vld [vmem:[#allocation7] sm:$0xf]
    %v625 = vlaneseq
    %v626 = vshrl.u32 %v625, 7
    %v627 = vsub.s32 0, %v626
    %v628 = vrot.slane %v623, %v627
    %v629 = vlaneseq
    %v630 = vshrl.u32 %v629, 7
    %v631 = vsub.s32 1, %v630
    %v632 = vrot.slane %v623, %v631
    %v633 = vlaneseq
    %v634 = vshrl.u32 %v633, 7
    %v635 = vsub.s32 2, %v634
    %v636 = vrot.slane %v623, %v635
    %v637 = vlaneseq
    %v638 = vshrl.u32 %v637, 7
    %v639 = vsub.s32 3, %v638
    %v640 = vrot.slane %v623, %v639
    %v773 = vunpack.c.l.b16 %v495
    %v774 = vunpack.c.h.b16 %v495
    %v775 = vunpack.c.l.b16 %v496
    %v776 = vunpack.c.h.b16 %v496
    %v777 = vunpack.c.l.b16 %v497
    %v778 = vunpack.c.h.b16 %v497
    %v779 = vunpack.c.l.b16 %v498
    %v780 = vunpack.c.h.b16 %v498
    %v781 = vunpack.c.l.b16 %v499
    %v782 = vunpack.c.h.b16 %v499
    %v783 = vunpack.c.l.b16 %v500
    %v784 = vunpack.c.h.b16 %v500
    %v785 = vunpack.c.l.b16 %v501
    %v786 = vunpack.c.h.b16 %v501
    %v787 = vunpack.c.l.b16 %v502
    %v788 = vunpack.c.h.b16 %v502
    %v789 = vunpack.c.l.b16 %v503
    %v790 = vunpack.c.h.b16 %v503
    %v791 = vunpack.c.l.b16 %v504
    %v792 = vunpack.c.h.b16 %v504
    %v793 = vunpack.c.l.b16 %v505
    %v794 = vunpack.c.h.b16 %v505
    %v795 = vunpack.c.l.b16 %v506
    %v796 = vunpack.c.h.b16 %v506
    %v797 = vunpack.c.l.b16 %v507
    %v798 = vunpack.c.h.b16 %v507
    %v799 = vunpack.c.l.b16 %v508
    %v800 = vunpack.c.h.b16 %v508
    %v801 = vunpack.c.l.b16 %v509
    %v802 = vunpack.c.h.b16 %v509
    %v803 = vunpack.c.l.b16 %v510
    %v804 = vunpack.c.h.b16 %v510
    %v805 = vunpack.c.l.b16 %v511
    %v806 = vunpack.c.h.b16 %v511
    %v807 = vunpack.c.l.b16 %v512
    %v808 = vunpack.c.h.b16 %v512
    %v809 = vunpack.c.l.b16 %v513
    %v810 = vunpack.c.h.b16 %v513
    %v811 = vunpack.c.l.b16 %v514
    %v812 = vunpack.c.h.b16 %v514
    %v813 = vunpack.c.l.b16 %v515
    %v814 = vunpack.c.h.b16 %v515
    %v815 = vunpack.c.l.b16 %v516
    %v816 = vunpack.c.h.b16 %v516
    %v817 = vunpack.c.l.b16 %v517
    %v818 = vunpack.c.h.b16 %v517
    %v819 = vunpack.c.l.b16 %v518
    %v820 = vunpack.c.h.b16 %v518
    %v821 = vunpack.c.l.b16 %v519
    %v822 = vunpack.c.h.b16 %v519
    %v823 = vunpack.c.l.b16 %v520
    %v824 = vunpack.c.h.b16 %v520
    %v825 = vunpack.c.l.b16 %v521
    %v826 = vunpack.c.h.b16 %v521
    %v827 = vunpack.c.l.b16 %v522
    %v828 = vunpack.c.h.b16 %v522
    %v829 = vunpack.c.l.b16 %v523
    %v830 = vunpack.c.h.b16 %v523
    %v831 = vunpack.c.l.b16 %v524
    %v832 = vunpack.c.h.b16 %v524
    %v833 = vunpack.c.l.b16 %v525
    %v834 = vunpack.c.h.b16 %v525
    %v835 = vunpack.c.l.b16 %v526
    %v836 = vunpack.c.h.b16 %v526
    %v837 = vunpack.c.l.b16 %v527
    %v838 = vunpack.c.h.b16 %v527
    %v839 = vunpack.c.l.b16 %v528
    %v840 = vunpack.c.h.b16 %v528
    %v841 = vunpack.c.l.b16 %v529
    %v842 = vunpack.c.h.b16 %v529
    %v843 = vunpack.c.l.b16 %v530
    %v844 = vunpack.c.h.b16 %v530
    %v845 = vunpack.c.l.b16 %v531
    %v846 = vunpack.c.h.b16 %v531
    %v847 = vunpack.c.l.b16 %v532
    %v848 = vunpack.c.h.b16 %v532
    %v849 = vunpack.c.l.b16 %v533
    %v850 = vunpack.c.h.b16 %v533
    %v851 = vunpack.c.l.b16 %v534
    %v852 = vunpack.c.h.b16 %v534
    %v853 = vunpack.c.l.b16 %v535
    %v854 = vunpack.c.h.b16 %v535
    %v855 = vunpack.c.l.b16 %v536
    %v856 = vunpack.c.h.b16 %v536
    %v857 = vunpack.c.l.b16 %v537
    %v858 = vunpack.c.h.b16 %v537
    %v859 = vunpack.c.l.b16 %v538
    %v860 = vunpack.c.h.b16 %v538
    %v861 = vunpack.c.l.b16 %v539
    %v862 = vunpack.c.h.b16 %v539
    %v863 = vunpack.c.l.b16 %v540
    %v864 = vunpack.c.h.b16 %v540
    %v865 = vunpack.c.l.b16 %v541
    %v866 = vunpack.c.h.b16 %v541
    %v867 = vunpack.c.l.b16 %v542
    %v868 = vunpack.c.h.b16 %v542
    %v869 = vunpack.c.l.b16 %v543
    %v870 = vunpack.c.h.b16 %v543
    %v871 = vunpack.c.l.b16 %v544
    %v872 = vunpack.c.h.b16 %v544
    %v873 = vunpack.c.l.b16 %v545
    %v874 = vunpack.c.h.b16 %v545
    %v875 = vunpack.c.l.b16 %v546
    %v876 = vunpack.c.h.b16 %v546
    %v877 = vunpack.c.l.b16 %v547
    %v878 = vunpack.c.h.b16 %v547
    %v879 = vunpack.c.l.b16 %v548
    %v880 = vunpack.c.h.b16 %v548
    %v881 = vunpack.c.l.b16 %v549
    %v882 = vunpack.c.h.b16 %v549
    %v883 = vunpack.c.l.b16 %v550
    %v884 = vunpack.c.h.b16 %v550
    %v885 = vunpack.c.l.b16 %v551
    %v886 = vunpack.c.h.b16 %v551
    %v887 = vunpack.c.l.b16 %v552
    %v888 = vunpack.c.h.b16 %v552
    %v889 = vunpack.c.l.b16 %v553
    %v890 = vunpack.c.h.b16 %v553
    %v891 = vunpack.c.l.b16 %v554
    %v892 = vunpack.c.h.b16 %v554
    %v893 = vunpack.c.l.b16 %v555
    %v894 = vunpack.c.h.b16 %v555
    %v895 = vunpack.c.l.b16 %v556
    %v896 = vunpack.c.h.b16 %v556
    %v897 = vunpack.c.l.b16 %v557
    %v898 = vunpack.c.h.b16 %v557
    %v899 = vunpack.c.l.b16 %v558
    %v900 = vunpack.c.h.b16 %v558
    %v901 = vunpack.c.l.b16 %v559
    %v902 = vunpack.c.h.b16 %v559
    %v903 = vunpack.c.l.b16 %v560
    %v904 = vunpack.c.h.b16 %v560
    %v905 = vunpack.c.l.b16 %v561
    %v906 = vunpack.c.h.b16 %v561
    %v907 = vunpack.c.l.b16 %v562
    %v908 = vunpack.c.h.b16 %v562
    %v909 = vunpack.c.l.b16 %v563
    %v910 = vunpack.c.h.b16 %v563
    %v911 = vunpack.c.l.b16 %v564
    %v912 = vunpack.c.h.b16 %v564
    %v913 = vunpack.c.l.b16 %v565
    %v914 = vunpack.c.h.b16 %v565
    %v915 = vunpack.c.l.b16 %v566
    %v916 = vunpack.c.h.b16 %v566
    %v917 = vunpack.c.l.b16 %v567
    %v918 = vunpack.c.h.b16 %v567
    %v919 = vunpack.c.l.b16 %v568
    %v920 = vunpack.c.h.b16 %v568
    %v921 = vunpack.c.l.b16 %v569
    %v922 = vunpack.c.h.b16 %v569
    %v923 = vunpack.c.l.b16 %v570
    %v924 = vunpack.c.h.b16 %v570
    %v925 = vunpack.c.l.b16 %v571
    %v926 = vunpack.c.h.b16 %v571
    %v927 = vunpack.c.l.b16 %v572
    %v928 = vunpack.c.h.b16 %v572
    %v929 = vunpack.c.l.b16 %v573
    %v930 = vunpack.c.h.b16 %v573
    %v931 = vunpack.c.l.b16 %v574
    %v932 = vunpack.c.h.b16 %v574
    %v933 = vunpack.c.l.b16 %v575
    %v934 = vunpack.c.h.b16 %v575
    %v935 = vunpack.c.l.b16 %v576
    %v936 = vunpack.c.h.b16 %v576
    %v937 = vunpack.c.l.b16 %v577
    %v938 = vunpack.c.h.b16 %v577
    %v939 = vunpack.c.l.b16 %v578
    %v940 = vunpack.c.h.b16 %v578
    %v941 = vunpack.c.l.b16 %v579
    %v942 = vunpack.c.h.b16 %v579
    %v943 = vunpack.c.l.b16 %v580
    %v944 = vunpack.c.h.b16 %v580
    %v945 = vunpack.c.l.b16 %v581
    %v946 = vunpack.c.h.b16 %v581
    %v947 = vunpack.c.l.b16 %v582
    %v948 = vunpack.c.h.b16 %v582
    %v949 = vunpack.c.l.b16 %v583
    %v950 = vunpack.c.h.b16 %v583
    %v951 = vunpack.c.l.b16 %v584
    %v952 = vunpack.c.h.b16 %v584
    %v953 = vunpack.c.l.b16 %v585
    %v954 = vunpack.c.h.b16 %v585
    %v955 = vunpack.c.l.b16 %v586
    %v956 = vunpack.c.h.b16 %v586
    %v957 = vunpack.c.l.b16 %v587
    %v958 = vunpack.c.h.b16 %v587
    %v959 = vunpack.c.l.b16 %v588
    %v960 = vunpack.c.h.b16 %v588
    %v961 = vunpack.c.l.b16 %v589
    %v962 = vunpack.c.h.b16 %v589
    %v963 = vunpack.c.l.b16 %v590
    %v964 = vunpack.c.h.b16 %v590
    %v965 = vunpack.c.l.b16 %v591
    %v966 = vunpack.c.h.b16 %v591
    %v967 = vunpack.c.l.b16 %v592
    %v968 = vunpack.c.h.b16 %v592
    %v969 = vunpack.c.l.b16 %v593
    %v970 = vunpack.c.h.b16 %v593
    %v971 = vunpack.c.l.b16 %v594
    %v972 = vunpack.c.h.b16 %v594
    %v973 = vunpack.c.l.b16 %v595
    %v974 = vunpack.c.h.b16 %v595
    %v975 = vunpack.c.l.b16 %v596
    %v976 = vunpack.c.h.b16 %v596
    %v977 = vunpack.c.l.b16 %v597
    %v978 = vunpack.c.h.b16 %v597
    %v979 = vunpack.c.l.b16 %v598
    %v980 = vunpack.c.h.b16 %v598
    %v981 = vunpack.c.l.b16 %v599
    %v982 = vunpack.c.h.b16 %v599
    %v983 = vunpack.c.l.b16 %v600
    %v984 = vunpack.c.h.b16 %v600
    %v985 = vunpack.c.l.b16 %v601
    %v986 = vunpack.c.h.b16 %v601
    %v987 = vunpack.c.l.b16 %v602
    %v988 = vunpack.c.h.b16 %v602
    %v989 = vunpack.c.l.b16 %v603
    %v990 = vunpack.c.h.b16 %v603
    %v991 = vunpack.c.l.b16 %v604
    %v992 = vunpack.c.h.b16 %v604
    %v993 = vunpack.c.l.b16 %v605
    %v994 = vunpack.c.h.b16 %v605
    %v995 = vunpack.c.l.b16 %v606
    %v996 = vunpack.c.h.b16 %v606
    %v997 = vunpack.c.l.b16 %v607
    %v998 = vunpack.c.h.b16 %v607
    %v999 = vunpack.c.l.b16 %v608
    %v1000 = vunpack.c.h.b16 %v608
    %v1001 = vunpack.c.l.b16 %v609
    %v1002 = vunpack.c.h.b16 %v609
    %v1003 = vunpack.c.l.b16 %v610
    %v1004 = vunpack.c.h.b16 %v610
    %v1005 = vunpack.c.l.b16 %v611
    %v1006 = vunpack.c.h.b16 %v611
    %v1007 = vunpack.c.l.b16 %v612
    %v1008 = vunpack.c.h.b16 %v612
    %v1009 = vunpack.c.l.b16 %v613
    %v1010 = vunpack.c.h.b16 %v613
    %v1011 = vunpack.c.l.b16 %v614
    %v1012 = vunpack.c.h.b16 %v614
    %v1013 = vunpack.c.l.b16 %v615
    %v1014 = vunpack.c.h.b16 %v615
    %v1015 = vunpack.c.l.b16 %v616
    %v1016 = vunpack.c.h.b16 %v616
    %v1017 = vunpack.c.l.b16 %v617
    %v1018 = vunpack.c.h.b16 %v617
    %v1019 = vunpack.c.l.b16 %v618
    %v1020 = vunpack.c.h.b16 %v618
    %v1021 = vunpack.c.l.b16 %v619
    %v1022 = vunpack.c.h.b16 %v619
    %v1023 = vunpack.c.l.b16 %v620
    %v1024 = vunpack.c.h.b16 %v620
    %v1025 = vunpack.c.l.b16 %v621
    %v1026 = vunpack.c.h.b16 %v621
    %v1027 = vunpack.c.l.b16 %v622
    %v1028 = vunpack.c.h.b16 %v622
    %v1029 = vpack.c.b16 %v777, %v773
    %v1030 = vpack.c.b16 %v778, %v774
    %v1031 = vpack.c.b16 %v779, %v775
    %v1032 = vpack.c.b16 %v780, %v776
    %v1033 = vpack.c.b16 %v785, %v781
    %v1034 = vpack.c.b16 %v786, %v782
    %v1035 = vpack.c.b16 %v787, %v783
    %v1036 = vpack.c.b16 %v788, %v784
    %v1037 = vpack.c.b16 %v793, %v789
    %v1038 = vpack.c.b16 %v794, %v790
    %v1039 = vpack.c.b16 %v795, %v791
    %v1040 = vpack.c.b16 %v796, %v792
    %v1041 = vpack.c.b16 %v801, %v797
    %v1042 = vpack.c.b16 %v802, %v798
    %v1043 = vpack.c.b16 %v803, %v799
    %v1044 = vpack.c.b16 %v804, %v800
    %v1045 = vpack.c.b16 %v809, %v805
    %v1046 = vpack.c.b16 %v810, %v806
    %v1047 = vpack.c.b16 %v811, %v807
    %v1048 = vpack.c.b16 %v812, %v808
    %v1049 = vpack.c.b16 %v817, %v813
    %v1050 = vpack.c.b16 %v818, %v814
    %v1051 = vpack.c.b16 %v819, %v815
    %v1052 = vpack.c.b16 %v820, %v816
    %v1053 = vpack.c.b16 %v825, %v821
    %v1054 = vpack.c.b16 %v826, %v822
    %v1055 = vpack.c.b16 %v827, %v823
    %v1056 = vpack.c.b16 %v828, %v824
    %v1057 = vpack.c.b16 %v833, %v829
    %v1058 = vpack.c.b16 %v834, %v830
    %v1059 = vpack.c.b16 %v835, %v831
    %v1060 = vpack.c.b16 %v836, %v832
    %v1061 = vpack.c.b16 %v841, %v837
    %v1062 = vpack.c.b16 %v842, %v838
    %v1063 = vpack.c.b16 %v843, %v839
    %v1064 = vpack.c.b16 %v844, %v840
    %v1065 = vpack.c.b16 %v849, %v845
    %v1066 = vpack.c.b16 %v850, %v846
    %v1067 = vpack.c.b16 %v851, %v847
    %v1068 = vpack.c.b16 %v852, %v848
    %v1069 = vpack.c.b16 %v857, %v853
    %v1070 = vpack.c.b16 %v858, %v854
    %v1071 = vpack.c.b16 %v859, %v855
    %v1072 = vpack.c.b16 %v860, %v856
    %v1073 = vpack.c.b16 %v865, %v861
    %v1074 = vpack.c.b16 %v866, %v862
    %v1075 = vpack.c.b16 %v867, %v863
    %v1076 = vpack.c.b16 %v868, %v864
    %v1077 = vpack.c.b16 %v873, %v869
    %v1078 = vpack.c.b16 %v874, %v870
    %v1079 = vpack.c.b16 %v875, %v871
    %v1080 = vpack.c.b16 %v876, %v872
    %v1081 = vpack.c.b16 %v881, %v877
    %v1082 = vpack.c.b16 %v882, %v878
    %v1083 = vpack.c.b16 %v883, %v879
    %v1084 = vpack.c.b16 %v884, %v880
    %v1085 = vpack.c.b16 %v889, %v885
    %v1086 = vpack.c.b16 %v890, %v886
    %v1087 = vpack.c.b16 %v891, %v887
    %v1088 = vpack.c.b16 %v892, %v888
    %v1089 = vpack.c.b16 %v897, %v893
    %v1090 = vpack.c.b16 %v898, %v894
    %v1091 = vpack.c.b16 %v899, %v895
    %v1092 = vpack.c.b16 %v900, %v896
    %v1093 = vpack.c.b16 %v905, %v901
    %v1094 = vpack.c.b16 %v906, %v902
    %v1095 = vpack.c.b16 %v907, %v903
    %v1096 = vpack.c.b16 %v908, %v904
    %v1097 = vpack.c.b16 %v913, %v909
    %v1098 = vpack.c.b16 %v914, %v910
    %v1099 = vpack.c.b16 %v915, %v911
    %v1100 = vpack.c.b16 %v916, %v912
    %v1101 = vpack.c.b16 %v921, %v917
    %v1102 = vpack.c.b16 %v922, %v918
    %v1103 = vpack.c.b16 %v923, %v919
    %v1104 = vpack.c.b16 %v924, %v920
    %v1105 = vpack.c.b16 %v929, %v925
    %v1106 = vpack.c.b16 %v930, %v926
    %v1107 = vpack.c.b16 %v931, %v927
    %v1108 = vpack.c.b16 %v932, %v928
    %v1109 = vpack.c.b16 %v937, %v933
    %v1110 = vpack.c.b16 %v938, %v934
    %v1111 = vpack.c.b16 %v939, %v935
    %v1112 = vpack.c.b16 %v940, %v936
    %v1113 = vpack.c.b16 %v945, %v941
    %v1114 = vpack.c.b16 %v946, %v942
    %v1115 = vpack.c.b16 %v947, %v943
    %v1116 = vpack.c.b16 %v948, %v944
    %v1117 = vpack.c.b16 %v953, %v949
    %v1118 = vpack.c.b16 %v954, %v950
    %v1119 = vpack.c.b16 %v955, %v951
    %v1120 = vpack.c.b16 %v956, %v952
    %v1121 = vpack.c.b16 %v961, %v957
    %v1122 = vpack.c.b16 %v962, %v958
    %v1123 = vpack.c.b16 %v963, %v959
    %v1124 = vpack.c.b16 %v964, %v960
    %v1125 = vpack.c.b16 %v969, %v965
    %v1126 = vpack.c.b16 %v970, %v966
    %v1127 = vpack.c.b16 %v971, %v967
    %v1128 = vpack.c.b16 %v972, %v968
    %v1129 = vpack.c.b16 %v977, %v973
    %v1130 = vpack.c.b16 %v978, %v974
    %v1131 = vpack.c.b16 %v979, %v975
    %v1132 = vpack.c.b16 %v980, %v976
    %v1133 = vpack.c.b16 %v985, %v981
    %v1134 = vpack.c.b16 %v986, %v982
    %v1135 = vpack.c.b16 %v987, %v983
    %v1136 = vpack.c.b16 %v988, %v984
    %v1137 = vpack.c.b16 %v993, %v989
    %v1138 = vpack.c.b16 %v994, %v990
    %v1139 = vpack.c.b16 %v995, %v991
    %v1140 = vpack.c.b16 %v996, %v992
    %v1141 = vpack.c.b16 %v1001, %v997
    %v1142 = vpack.c.b16 %v1002, %v998
    %v1143 = vpack.c.b16 %v1003, %v999
    %v1144 = vpack.c.b16 %v1004, %v1000
    %v1145 = vpack.c.b16 %v1009, %v1005
    %v1146 = vpack.c.b16 %v1010, %v1006
    %v1147 = vpack.c.b16 %v1011, %v1007
    %v1148 = vpack.c.b16 %v1012, %v1008
    %v1149 = vpack.c.b16 %v1017, %v1013
    %v1150 = vpack.c.b16 %v1018, %v1014
    %v1151 = vpack.c.b16 %v1019, %v1015
    %v1152 = vpack.c.b16 %v1020, %v1016
    %v1153 = vpack.c.b16 %v1025, %v1021
    %v1154 = vpack.c.b16 %v1026, %v1022
    %v1155 = vpack.c.b16 %v1027, %v1023
    %v1156 = vpack.c.b16 %v1028, %v1024
    %1285 = vmatprep.subr.bf16.mxu0 %v1030
    %1286 = vmatpush1.bf16.msra.mxu0 %v1029
    %1287 = vmatprep.subr.bf16.mxu0 %v1034
    %1288 = vmatpush1.bf16.msra.mxu0 %v1033
    %1289 = vmatprep.subr.bf16.mxu0 %v1038
    %1290 = vmatpush1.bf16.msra.mxu0 %v1037
    %1291 = vmatprep.subr.bf16.mxu0 %v1042
    %1292 = vmatpush1.bf16.msra.mxu0 %v1041
    %1293 = vmatprep.subr.bf16.mxu0 %v1046
    %1294 = vmatpush1.bf16.msra.mxu0 %v1045
    %1295 = vmatprep.subr.bf16.mxu0 %v1050
    %1296 = vmatpush1.bf16.msra.mxu0 %v1049
    %1297 = vmatprep.subr.bf16.mxu0 %v1054
    %1298 = vmatpush1.bf16.msra.mxu0 %v1053
    %1299 = vmatprep.subr.bf16.mxu0 %v1058
    %1300 = vmatpush1.bf16.msra.mxu0 %v1057
    %1301 = vmatprep.subr.bf16.mxu0 %v1062
    %1302 = vmatpush1.bf16.msra.mxu0 %v1061
    %1303 = vmatprep.subr.bf16.mxu0 %v1066
    %1304 = vmatpush1.bf16.msra.mxu0 %v1065
    %1305 = vmatprep.subr.bf16.mxu0 %v1070
    %1306 = vmatpush1.bf16.msra.mxu0 %v1069
    %1307 = vmatprep.subr.bf16.mxu0 %v1074
    %1308 = vmatpush1.bf16.msra.mxu0 %v1073
    %1309 = vmatprep.subr.bf16.mxu0 %v1078
    %1310 = vmatpush1.bf16.msra.mxu0 %v1077
    %1311 = vmatprep.subr.bf16.mxu0 %v1082
    %1312 = vmatpush1.bf16.msra.mxu0 %v1081
    %1313 = vmatprep.subr.bf16.mxu0 %v1086
    %1314 = vmatpush1.bf16.msra.mxu0 %v1085
    %1315 = vmatprep.subr.bf16.mxu0 %v1090
    %1316 = vmatpush1.bf16.msra.mxu0 %v1089
    %1317 = vmatprep.mubr.bf16.mxu0 %v492
    %1318 = vmatmul.mubr.bf16.gmra.mrb[0].mxu0 %v491
    %v1319 = vpop.f32.mrb[0].mxu0
    %v1320 = vadd.f32 %v628, %v1319
    %v1321 = vpop.f32.mrb[0].mxu0
    %v1322 = vadd.f32 %v632, %v1321
    %v1323 = vpop.f32.mrb[0].mxu0
    %v1324 = vadd.f32 %v628, %v1323
    %v1325 = vpop.f32.mrb[0].mxu0
    %v1326 = vadd.f32 %v632, %v1325
    %1327 = vdwg.mxu0
    %1328 = vmatprep.subr.bf16.mxu0 %v1094
    %1329 = vmatpush1.bf16.msra.mxu0 %v1093
    %1330 = vmatprep.subr.bf16.mxu0 %v1098
    %1331 = vmatpush1.bf16.msra.mxu0 %v1097
    %1332 = vmatprep.subr.bf16.mxu0 %v1102
    %1333 = vmatpush1.bf16.msra.mxu0 %v1101
    %1334 = vmatprep.subr.bf16.mxu0 %v1106
    %1335 = vmatpush1.bf16.msra.mxu0 %v1105
    %1336 = vmatprep.subr.bf16.mxu0 %v1110
    %1337 = vmatpush1.bf16.msra.mxu0 %v1109
    %1338 = vmatprep.subr.bf16.mxu0 %v1114
    %1339 = vmatpush1.bf16.msra.mxu0 %v1113
    %1340 = vmatprep.subr.bf16.mxu0 %v1118
    %1341 = vmatpush1.bf16.msra.mxu0 %v1117
    %1342 = vmatprep.subr.bf16.mxu0 %v1122
    %1343 = vmatpush1.bf16.msra.mxu0 %v1121
    %1344 = vmatprep.subr.bf16.mxu0 %v1126
    %1345 = vmatpush1.bf16.msra.mxu0 %v1125
    %1346 = vmatprep.subr.bf16.mxu0 %v1130
    %1347 = vmatpush1.bf16.msra.mxu0 %v1129
    %1348 = vmatprep.subr.bf16.mxu0 %v1134
    %1349 = vmatpush1.bf16.msra.mxu0 %v1133
    %1350 = vmatprep.subr.bf16.mxu0 %v1138
    %1351 = vmatpush1.bf16.msra.mxu0 %v1137
    %1352 = vmatprep.subr.bf16.mxu0 %v1142
    %1353 = vmatpush1.bf16.msra.mxu0 %v1141
    %1354 = vmatprep.subr.bf16.mxu0 %v1146
    %1355 = vmatpush1.bf16.msra.mxu0 %v1145
    %1356 = vmatprep.subr.bf16.mxu0 %v1150
    %1357 = vmatpush1.bf16.msra.mxu0 %v1149
    %1358 = vmatprep.subr.bf16.mxu0 %v1154
    %1359 = vmatpush1.bf16.msra.mxu0 %v1153
    %1360 = vmatprep.mubr.bf16.mxu0 %v494
    %1361 = vmatmul.mubr.bf16.gmra.mrb[0].mxu0 %v493
    %v1362 = vpop.f32.mrb[0].mxu0
    %v1363 = vadd.f32 %v1320, %v1362
    %v1364 = vpop.f32.mrb[0].mxu0
    %v1365 = vadd.f32 %v1322, %v1364
    %v1366 = vpop.f32.mrb[0].mxu0
    %v1367 = vadd.f32 %v1324, %v1366
    %v1368 = vpop.f32.mrb[0].mxu0
    %v1369 = vadd.f32 %v1326, %v1368
    %1370 = vdwg.mxu0
    %1371 = vmatprep.subr.bf16.mxu0 %v1032
    %1372 = vmatpush1.bf16.msra.mxu0 %v1031
    %1373 = vmatprep.subr.bf16.mxu0 %v1036
    %1374 = vmatpush1.bf16.msra.mxu0 %v1035
    %1375 = vmatprep.subr.bf16.mxu0 %v1040
    %1376 = vmatpush1.bf16.msra.mxu0 %v1039
    %1377 = vmatprep.subr.bf16.mxu0 %v1044
    %1378 = vmatpush1.bf16.msra.mxu0 %v1043
    %1379 = vmatprep.subr.bf16.mxu0 %v1048
    %1380 = vmatpush1.bf16.msra.mxu0 %v1047
    %1381 = vmatprep.subr.bf16.mxu0 %v1052
    %1382 = vmatpush1.bf16.msra.mxu0 %v1051
    %1383 = vmatprep.subr.bf16.mxu0 %v1056
    %1384 = vmatpush1.bf16.msra.mxu0 %v1055
    %1385 = vmatprep.subr.bf16.mxu0 %v1060
    %1386 = vmatpush1.bf16.msra.mxu0 %v1059
    %1387 = vmatprep.subr.bf16.mxu0 %v1064
    %1388 = vmatpush1.bf16.msra.mxu0 %v1063
    %1389 = vmatprep.subr.bf16.mxu0 %v1068
    %1390 = vmatpush1.bf16.msra.mxu0 %v1067
    %1391 = vmatprep.subr.bf16.mxu0 %v1072
    %1392 = vmatpush1.bf16.msra.mxu0 %v1071
    %1393 = vmatprep.subr.bf16.mxu0 %v1076
    %1394 = vmatpush1.bf16.msra.mxu0 %v1075
    %1395 = vmatprep.subr.bf16.mxu0 %v1080
    %1396 = vmatpush1.bf16.msra.mxu0 %v1079
    %1397 = vmatprep.subr.bf16.mxu0 %v1084
    %1398 = vmatpush1.bf16.msra.mxu0 %v1083
    %1399 = vmatprep.subr.bf16.mxu0 %v1088
    %1400 = vmatpush1.bf16.msra.mxu0 %v1087
    %1401 = vmatprep.subr.bf16.mxu0 %v1092
    %1402 = vmatpush1.bf16.msra.mxu0 %v1091
    %1403 = vmatprep.mubr.bf16.mxu0 %v492
    %1404 = vmatmul.mubr.bf16.gmra.mrb[0].mxu0 %v491
    %v1405 = vpop.f32.mrb[0].mxu0
    %v1406 = vadd.f32 %v636, %v1405
    %v1407 = vpop.f32.mrb[0].mxu0
    %v1408 = vadd.f32 %v640, %v1407
    %v1409 = vpop.f32.mrb[0].mxu0
    %v1410 = vadd.f32 %v636, %v1409
    %v1411 = vpop.f32.mrb[0].mxu0
    %v1412 = vadd.f32 %v640, %v1411
    %1413 = vdwg.mxu0
    %1414 = vmatprep.subr.bf16.mxu0 %v1096
    %1415 = vmatpush1.bf16.msra.mxu0 %v1095
    %1416 = vmatprep.subr.bf16.mxu0 %v1100
    %1417 = vmatpush1.bf16.msra.mxu0 %v1099
    %1418 = vmatprep.subr.bf16.mxu0 %v1104
    %1419 = vmatpush1.bf16.msra.mxu0 %v1103
    %1420 = vmatprep.subr.bf16.mxu0 %v1108
    %1421 = vmatpush1.bf16.msra.mxu0 %v1107
    %1422 = vmatprep.subr.bf16.mxu0 %v1112
    %1423 = vmatpush1.bf16.msra.mxu0 %v1111
    %1424 = vmatprep.subr.bf16.mxu0 %v1116
    %1425 = vmatpush1.bf16.msra.mxu0 %v1115
    %1426 = vmatprep.subr.bf16.mxu0 %v1120
    %1427 = vmatpush1.bf16.msra.mxu0 %v1119
    %1428 = vmatprep.subr.bf16.mxu0 %v1124
    %1429 = vmatpush1.bf16.msra.mxu0 %v1123
    %1430 = vmatprep.subr.bf16.mxu0 %v1128
    %1431 = vmatpush1.bf16.msra.mxu0 %v1127
    %1432 = vmatprep.subr.bf16.mxu0 %v1132
    %1433 = vmatpush1.bf16.msra.mxu0 %v1131
    %1434 = vmatprep.subr.bf16.mxu0 %v1136
    %1435 = vmatpush1.bf16.msra.mxu0 %v1135
    %1436 = vmatprep.subr.bf16.mxu0 %v1140
    %1437 = vmatpush1.bf16.msra.mxu0 %v1139
    %1438 = vmatprep.subr.bf16.mxu0 %v1144
    %1439 = vmatpush1.bf16.msra.mxu0 %v1143
    %1440 = vmatprep.subr.bf16.mxu0 %v1148
    %1441 = vmatpush1.bf16.msra.mxu0 %v1147
    %1442 = vmatprep.subr.bf16.mxu0 %v1152
    %1443 = vmatpush1.bf16.msra.mxu0 %v1151
    %1444 = vmatprep.subr.bf16.mxu0 %v1156
    %1445 = vmatpush1.bf16.msra.mxu0 %v1155
    %1446 = vmatprep.mubr.bf16.mxu0 %v494
    %1447 = vmatmul.mubr.bf16.gmra.mrb[0].mxu0 %v493
    %v1448 = vpop.f32.mrb[0].mxu0
    %v1449 = vadd.f32 %v1406, %v1448
    %v1450 = vpop.f32.mrb[0].mxu0
    %v1451 = vadd.f32 %v1408, %v1450
    %v1452 = vpop.f32.mrb[0].mxu0
    %v1453 = vadd.f32 %v1410, %v1452
    %v1454 = vpop.f32.mrb[0].mxu0
    %v1455 = vadd.f32 %v1412, %v1454
    %1456 = vdwg.mxu0
    %vm1457 = vcmp.ge.f32.partialorder %v1363, 0.0
    %vm1458 = vcmp.ge.f32.partialorder %v1365, 0.0
    %vm1459 = vcmp.ge.f32.partialorder %v1449, 0.0
    %vm1460 = vcmp.ge.f32.partialorder %v1451, 0.0
    %vm1461 = vcmp.ge.f32.partialorder %v1367, 0.0
    %vm1462 = vcmp.ge.f32.partialorder %v1369, 0.0
    %vm1463 = vcmp.ge.f32.partialorder %v1453, 0.0
    %vm1464 = vcmp.ge.f32.partialorder %v1455, 0.0
    %v1465 = vmul.f32 %v1363, 0.22916667
    %v1466 = vmul.f32 %v1365, 0.22916667
    %v1467 = vmul.f32 %v1449, 0.22916667
    %v1468 = vmul.f32 %v1451, 0.22916667
    %v1469 = vmul.f32 %v1367, 0.22916667
    %v1470 = vmul.f32 %v1369, 0.22916667
    %v1471 = vmul.f32 %v1453, 0.22916667
    %v1472 = vmul.f32 %v1455, 0.22916667
    %v1473 = vsel %vm1457, %v1363, %v1465
    %v1474 = vsel %vm1458, %v1365, %v1466
    %v1475 = vsel %vm1459, %v1449, %v1467
    %v1476 = vsel %vm1460, %v1451, %v1468
    %v1477 = vsel %vm1461, %v1367, %v1469
    %v1478 = vsel %vm1462, %v1369, %v1470
    %v1479 = vsel %vm1463, %v1453, %v1471
    %v1480 = vsel %vm1464, %v1455, %v1472
    %v1481 = vpack.c.bf16 %v1477, %v1473
    %v1482 = vpack.c.bf16 %v1478, %v1474
    %v1483 = vpack.c.bf16 %v1479, %v1475
    %v1484 = vpack.c.bf16 %v1480, %v1476
    %v1485 = vld [vmem:[#allocation9] sm:$0xff]
    %v1486 = vld [vmem:[#allocation9 + $0x8] sm:$0xf]
    %v1487 = vld [vmem:[#allocation9 + $0xc] sm:$0xff]
    %v1488 = vld [vmem:[#allocation9 + $0x14] sm:$0xf]
    %v1489 = vld [vmem:[#allocation9 + $0x18] sm:$0xff]
    %v1490 = vld [vmem:[#allocation9 + $0x20] sm:$0xf]
    %v1491 = vld [vmem:[#allocation9 + $0x24] sm:$0xff]
    %v1492 = vld [vmem:[#allocation9 + $0x2c] sm:$0xf]
    %v1493 = vld [vmem:[#allocation9 + $0x30] sm:$0xff]
    %v1494 = vld [vmem:[#allocation9 + $0x38] sm:$0xf]
    %v1495 = vld [vmem:[#allocation9 + $0x3c] sm:$0xff]
    %v1496 = vld [vmem:[#allocation9 + $0x44] sm:$0xf]
    %v1497 = vld [vmem:[#allocation9 + $0x48] sm:$0xff]
    %v1498 = vld [vmem:[#allocation9 + $0x50] sm:$0xf]
    %v1499 = vld [vmem:[#allocation9 + $0x54] sm:$0xff]
    %v1500 = vld [vmem:[#allocation9 + $0x5c] sm:$0xf]
    %v1501 = vld [vmem:[#allocation9 + $0x60] sm:$0xff]
    %v1502 = vld [vmem:[#allocation9 + $0x68] sm:$0xf]
    %v1503 = vld [vmem:[#allocation9 + $0x6c] sm:$0xff]
    %v1504 = vld [vmem:[#allocation9 + $0x74] sm:$0xf]
    %v1505 = vld [vmem:[#allocation9 + $0x78] sm:$0xff]
    %v1506 = vld [vmem:[#allocation9 + $0x80] sm:$0xf]
    %v1507 = vld [vmem:[#allocation9 + $0x84] sm:$0xff]
    %v1508 = vld [vmem:[#allocation9 + $0x8c] sm:$0xf]
    %v1509 = vld [vmem:[#allocation9 + $0x90] sm:$0xff]
    %v1510 = vld [vmem:[#allocation9 + $0x98] sm:$0xf]
    %v1511 = vld [vmem:[#allocation9 + $0x9c] sm:$0xff]
    %v1512 = vld [vmem:[#allocation9 + $0xa4] sm:$0xf]
    %v1513 = vld [vmem:[#allocation9 + $0xa8] sm:$0xff]
    %v1514 = vld [vmem:[#allocation9 + $0xb0] sm:$0xf]
    %v1515 = vld [vmem:[#allocation9 + $0xb4] sm:$0xff]
    %v1516 = vld [vmem:[#allocation9 + $0xbc] sm:$0xf]
    %v1517 = vld [vmem:[#allocation9 + $0xc0] sm:$0xff]
    %v1518 = vld [vmem:[#allocation9 + $0xc8] sm:$0xf]
    %v1519 = vld [vmem:[#allocation9 + $0xcc] sm:$0xff]
    %v1520 = vld [vmem:[#allocation9 + $0xd4] sm:$0xf]
    %v1521 = vld [vmem:[#allocation9 + $0xd8] sm:$0xff]
    %v1522 = vld [vmem:[#allocation9 + $0xe0] sm:$0xf]
    %v1523 = vld [vmem:[#allocation9 + $0xe4] sm:$0xff]
    %v1524 = vld [vmem:[#allocation9 + $0xec] sm:$0xf]
    %v1525 = vld [vmem:[#allocation9 + $0xf0] sm:$0xff]
    %v1526 = vld [vmem:[#allocation9 + $0xf8] sm:$0xf]
    %v1527 = vld [vmem:[#allocation9 + $0xfc] sm:$0xff]
    %v1528 = vld [vmem:[#allocation9 + $0x104] sm:$0xf]
    %v1529 = vld [vmem:[#allocation9 + $0x108] sm:$0xff]
    %v1530 = vld [vmem:[#allocation9 + $0x110] sm:$0xf]
    %v1531 = vld [vmem:[#allocation9 + $0x114] sm:$0xff]
    %v1532 = vld [vmem:[#allocation9 + $0x11c] sm:$0xf]
    %v1533 = vld [vmem:[#allocation9 + $0x120] sm:$0xff]
    %v1534 = vld [vmem:[#allocation9 + $0x128] sm:$0xf]
    %v1535 = vld [vmem:[#allocation9 + $0x12c] sm:$0xff]
    %v1536 = vld [vmem:[#allocation9 + $0x134] sm:$0xf]
    %v1537 = vld [vmem:[#allocation9 + $0x138] sm:$0xff]
    %v1538 = vld [vmem:[#allocation9 + $0x140] sm:$0xf]
    %v1539 = vld [vmem:[#allocation9 + $0x144] sm:$0xff]
    %v1540 = vld [vmem:[#allocation9 + $0x14c] sm:$0xf]
    %v1541 = vld [vmem:[#allocation9 + $0x150] sm:$0xff]
    %v1542 = vld [vmem:[#allocation9 + $0x158] sm:$0xf]
    %v1543 = vld [vmem:[#allocation9 + $0x15c] sm:$0xff]
    %v1544 = vld [vmem:[#allocation9 + $0x164] sm:$0xf]
    %v1545 = vld [vmem:[#allocation9 + $0x168] sm:$0xff]
    %v1546 = vld [vmem:[#allocation9 + $0x170] sm:$0xf]
    %v1547 = vld [vmem:[#allocation9 + $0x174] sm:$0xff]
    %v1548 = vld [vmem:[#allocation9 + $0x17c] sm:$0xf]
    %v1549 = vld [vmem:[#allocation9 + $0x180] sm:$0xff]
    %v1550 = vld [vmem:[#allocation9 + $0x188] sm:$0xf]
    %v1551 = vld [vmem:[#allocation9 + $0x18c] sm:$0xff]
    %v1552 = vld [vmem:[#allocation9 + $0x194] sm:$0xf]
    %v1553 = vld [vmem:[#allocation9 + $0x198] sm:$0xff]
    %v1554 = vld [vmem:[#allocation9 + $0x1a0] sm:$0xf]
    %v1555 = vld [vmem:[#allocation9 + $0x1a4] sm:$0xff]
    %v1556 = vld [vmem:[#allocation9 + $0x1ac] sm:$0xf]
    %v1557 = vld [vmem:[#allocation9 + $0x1b0] sm:$0xff]
    %v1558 = vld [vmem:[#allocation9 + $0x1b8] sm:$0xf]
    %v1559 = vld [vmem:[#allocation9 + $0x1bc] sm:$0xff]
    %v1560 = vld [vmem:[#allocation9 + $0x1c4] sm:$0xf]
    %v1561 = vld [vmem:[#allocation9 + $0x1c8] sm:$0xff]
    %v1562 = vld [vmem:[#allocation9 + $0x1d0] sm:$0xf]
    %v1563 = vld [vmem:[#allocation9 + $0x1d4] sm:$0xff]
    %v1564 = vld [vmem:[#allocation9 + $0x1dc] sm:$0xf]
    %v1565 = vld [vmem:[#allocation9 + $0x1e0] sm:$0xff]
    %v1566 = vld [vmem:[#allocation9 + $0x1e8] sm:$0xf]
    %v1567 = vld [vmem:[#allocation9 + $0x1ec] sm:$0xff]
    %v1568 = vld [vmem:[#allocation9 + $0x1f4] sm:$0xf]
    %v1569 = vld [vmem:[#allocation9 + $0x1f8] sm:$0xff]
    %v1570 = vld [vmem:[#allocation9 + $0x200] sm:$0xf]
    %v1571 = vld [vmem:[#allocation9 + $0x204] sm:$0xff]
    %v1572 = vld [vmem:[#allocation9 + $0x20c] sm:$0xf]
    %v1573 = vld [vmem:[#allocation9 + $0x210] sm:$0xff]
    %v1574 = vld [vmem:[#allocation9 + $0x218] sm:$0xf]
    %v1575 = vld [vmem:[#allocation9 + $0x21c] sm:$0xff]
    %v1576 = vld [vmem:[#allocation9 + $0x224] sm:$0xf]
    %v1577 = vld [vmem:[#allocation9 + $0x228] sm:$0xff]
    %v1578 = vld [vmem:[#allocation9 + $0x230] sm:$0xf]
    %v1579 = vld [vmem:[#allocation9 + $0x234] sm:$0xff]
    %v1580 = vld [vmem:[#allocation9 + $0x23c] sm:$0xf]
    %v1581 = vld [vmem:[#allocation9 + $0x240] sm:$0xff]
    %v1582 = vld [vmem:[#allocation9 + $0x248] sm:$0xf]
    %v1583 = vld [vmem:[#allocation9 + $0x24c] sm:$0xff]
    %v1584 = vld [vmem:[#allocation9 + $0x254] sm:$0xf]
    %v1585 = vld [vmem:[#allocation9 + $0x258] sm:$0xff]
    %v1586 = vld [vmem:[#allocation9 + $0x260] sm:$0xf]
    %v1587 = vld [vmem:[#allocation9 + $0x264] sm:$0xff]
    %v1588 = vld [vmem:[#allocation9 + $0x26c] sm:$0xf]
    %v1589 = vld [vmem:[#allocation9 + $0x270] sm:$0xff]
    %v1590 = vld [vmem:[#allocation9 + $0x278] sm:$0xf]
    %v1591 = vld [vmem:[#allocation9 + $0x27c] sm:$0xff]
    %v1592 = vld [vmem:[#allocation9 + $0x284] sm:$0xf]
    %v1593 = vld [vmem:[#allocation9 + $0x288] sm:$0xff]
    %v1594 = vld [vmem:[#allocation9 + $0x290] sm:$0xf]
    %v1595 = vld [vmem:[#allocation9 + $0x294] sm:$0xff]
    %v1596 = vld [vmem:[#allocation9 + $0x29c] sm:$0xf]
    %v1597 = vld [vmem:[#allocation9 + $0x2a0] sm:$0xff]
    %v1598 = vld [vmem:[#allocation9 + $0x2a8] sm:$0xf]
    %v1599 = vld [vmem:[#allocation9 + $0x2ac] sm:$0xff]
    %v1600 = vld [vmem:[#allocation9 + $0x2b4] sm:$0xf]
    %v1601 = vld [vmem:[#allocation9 + $0x2b8] sm:$0xff]
    %v1602 = vld [vmem:[#allocation9 + $0x2c0] sm:$0xf]
    %v1603 = vld [vmem:[#allocation9 + $0x2c4] sm:$0xff]
    %v1604 = vld [vmem:[#allocation9 + $0x2cc] sm:$0xf]
    %v1605 = vld [vmem:[#allocation9 + $0x2d0] sm:$0xff]
    %v1606 = vld [vmem:[#allocation9 + $0x2d8] sm:$0xf]
    %v1607 = vld [vmem:[#allocation9 + $0x2dc] sm:$0xff]
    %v1608 = vld [vmem:[#allocation9 + $0x2e4] sm:$0xf]
    %v1609 = vld [vmem:[#allocation9 + $0x2e8] sm:$0xff]
    %v1610 = vld [vmem:[#allocation9 + $0x2f0] sm:$0xf]
    %v1611 = vld [vmem:[#allocation9 + $0x2f4] sm:$0xff]
    %v1612 = vld [vmem:[#allocation9 + $0x2fc] sm:$0xf]
    %v1613 = vld [vmem:[#allocation10] sm:$0x7]
    %v1615 = vlaneseq
    %v1616 = vshrl.u32 %v1615, 7
    %v1617 = vsub.s32 0, %v1616
    %v1618 = vrot.slane %v1613, %v1617
    %v1619 = vlaneseq
    %v1620 = vshrl.u32 %v1619, 7
    %v1621 = vsub.s32 1, %v1620
    %v1622 = vrot.slane %v1613, %v1621
    %v1623 = vlaneseq
    %v1624 = vshrl.u32 %v1623, 7
    %v1625 = vsub.s32 2, %v1624
    %v1626 = vrot.slane %v1613, %v1625
    %v1758 = vunpack.c.l.b16 %v1485
    %v1759 = vunpack.c.h.b16 %v1485
    %v1760 = vunpack.c.l.b16 %v1486
    %v1761 = vunpack.c.l.b16 %v1487
    %v1762 = vunpack.c.h.b16 %v1487
    %v1763 = vunpack.c.l.b16 %v1488
    %v1764 = vunpack.c.l.b16 %v1489
    %v1765 = vunpack.c.h.b16 %v1489
    %v1766 = vunpack.c.l.b16 %v1490
    %v1767 = vunpack.c.l.b16 %v1491
    %v1768 = vunpack.c.h.b16 %v1491
    %v1769 = vunpack.c.l.b16 %v1492
    %v1770 = vunpack.c.l.b16 %v1493
    %v1771 = vunpack.c.h.b16 %v1493
    %v1772 = vunpack.c.l.b16 %v1494
    %v1773 = vunpack.c.l.b16 %v1495
    %v1774 = vunpack.c.h.b16 %v1495
    %v1775 = vunpack.c.l.b16 %v1496
    %v1776 = vunpack.c.l.b16 %v1497
    %v1777 = vunpack.c.h.b16 %v1497
    %v1778 = vunpack.c.l.b16 %v1498
    %v1779 = vunpack.c.l.b16 %v1499
    %v1780 = vunpack.c.h.b16 %v1499
    %v1781 = vunpack.c.l.b16 %v1500
    %v1782 = vunpack.c.l.b16 %v1501
    %v1783 = vunpack.c.h.b16 %v1501
    %v1784 = vunpack.c.l.b16 %v1502
    %v1785 = vunpack.c.l.b16 %v1503
    %v1786 = vunpack.c.h.b16 %v1503
    %v1787 = vunpack.c.l.b16 %v1504
    %v1788 = vunpack.c.l.b16 %v1505
    %v1789 = vunpack.c.h.b16 %v1505
    %v1790 = vunpack.c.l.b16 %v1506
    %v1791 = vunpack.c.l.b16 %v1507
    %v1792 = vunpack.c.h.b16 %v1507
    %v1793 = vunpack.c.l.b16 %v1508
    %v1794 = vunpack.c.l.b16 %v1509
    %v1795 = vunpack.c.h.b16 %v1509
    %v1796 = vunpack.c.l.b16 %v1510
    %v1797 = vunpack.c.l.b16 %v1511
    %v1798 = vunpack.c.h.b16 %v1511
    %v1799 = vunpack.c.l.b16 %v1512
    %v1800 = vunpack.c.l.b16 %v1513
    %v1801 = vunpack.c.h.b16 %v1513
    %v1802 = vunpack.c.l.b16 %v1514
    %v1803 = vunpack.c.l.b16 %v1515
    %v1804 = vunpack.c.h.b16 %v1515
    %v1805 = vunpack.c.l.b16 %v1516
    %v1806 = vunpack.c.l.b16 %v1517
    %v1807 = vunpack.c.h.b16 %v1517
    %v1808 = vunpack.c.l.b16 %v1518
    %v1809 = vunpack.c.l.b16 %v1519
    %v1810 = vunpack.c.h.b16 %v1519
    %v1811 = vunpack.c.l.b16 %v1520
    %v1812 = vunpack.c.l.b16 %v1521
    %v1813 = vunpack.c.h.b16 %v1521
    %v1814 = vunpack.c.l.b16 %v1522
    %v1815 = vunpack.c.l.b16 %v1523
    %v1816 = vunpack.c.h.b16 %v1523
    %v1817 = vunpack.c.l.b16 %v1524
    %v1818 = vunpack.c.l.b16 %v1525
    %v1819 = vunpack.c.h.b16 %v1525
    %v1820 = vunpack.c.l.b16 %v1526
    %v1821 = vunpack.c.l.b16 %v1527
    %v1822 = vunpack.c.h.b16 %v1527
    %v1823 = vunpack.c.l.b16 %v1528
    %v1824 = vunpack.c.l.b16 %v1529
    %v1825 = vunpack.c.h.b16 %v1529
    %v1826 = vunpack.c.l.b16 %v1530
    %v1827 = vunpack.c.l.b16 %v1531
    %v1828 = vunpack.c.h.b16 %v1531
    %v1829 = vunpack.c.l.b16 %v1532
    %v1830 = vunpack.c.l.b16 %v1533
    %v1831 = vunpack.c.h.b16 %v1533
    %v1832 = vunpack.c.l.b16 %v1534
    %v1833 = vunpack.c.l.b16 %v1535
    %v1834 = vunpack.c.h.b16 %v1535
    %v1835 = vunpack.c.l.b16 %v1536
    %v1836 = vunpack.c.l.b16 %v1537
    %v1837 = vunpack.c.h.b16 %v1537
    %v1838 = vunpack.c.l.b16 %v1538
    %v1839 = vunpack.c.l.b16 %v1539
    %v1840 = vunpack.c.h.b16 %v1539
    %v1841 = vunpack.c.l.b16 %v1540
    %v1842 = vunpack.c.l.b16 %v1541
    %v1843 = vunpack.c.h.b16 %v1541
    %v1844 = vunpack.c.l.b16 %v1542
    %v1845 = vunpack.c.l.b16 %v1543
    %v1846 = vunpack.c.h.b16 %v1543
    %v1847 = vunpack.c.l.b16 %v1544
    %v1848 = vunpack.c.l.b16 %v1545
    %v1849 = vunpack.c.h.b16 %v1545
    %v1850 = vunpack.c.l.b16 %v1546
    %v1851 = vunpack.c.l.b16 %v1547
    %v1852 = vunpack.c.h.b16 %v1547
    %v1853 = vunpack.c.l.b16 %v1548
    %v1854 = vunpack.c.l.b16 %v1549
    %v1855 = vunpack.c.h.b16 %v1549
    %v1856 = vunpack.c.l.b16 %v1550
    %v1857 = vunpack.c.l.b16 %v1551
    %v1858 = vunpack.c.h.b16 %v1551
    %v1859 = vunpack.c.l.b16 %v1552
    %v1860 = vunpack.c.l.b16 %v1553
    %v1861 = vunpack.c.h.b16 %v1553
    %v1862 = vunpack.c.l.b16 %v1554
    %v1863 = vunpack.c.l.b16 %v1555
    %v1864 = vunpack.c.h.b16 %v1555
    %v1865 = vunpack.c.l.b16 %v1556
    %v1866 = vunpack.c.l.b16 %v1557
    %v1867 = vunpack.c.h.b16 %v1557
    %v1868 = vunpack.c.l.b16 %v1558
    %v1869 = vunpack.c.l.b16 %v1559
    %v1870 = vunpack.c.h.b16 %v1559
    %v1871 = vunpack.c.l.b16 %v1560
    %v1872 = vunpack.c.l.b16 %v1561
    %v1873 = vunpack.c.h.b16 %v1561
    %v1874 = vunpack.c.l.b16 %v1562
    %v1875 = vunpack.c.l.b16 %v1563
    %v1876 = vunpack.c.h.b16 %v1563
    %v1877 = vunpack.c.l.b16 %v1564
    %v1878 = vunpack.c.l.b16 %v1565
    %v1879 = vunpack.c.h.b16 %v1565
    %v1880 = vunpack.c.l.b16 %v1566
    %v1881 = vunpack.c.l.b16 %v1567
    %v1882 = vunpack.c.h.b16 %v1567
    %v1883 = vunpack.c.l.b16 %v1568
    %v1884 = vunpack.c.l.b16 %v1569
    %v1885 = vunpack.c.h.b16 %v1569
    %v1886 = vunpack.c.l.b16 %v1570
    %v1887 = vunpack.c.l.b16 %v1571
    %v1888 = vunpack.c.h.b16 %v1571
    %v1889 = vunpack.c.l.b16 %v1572
    %v1890 = vunpack.c.l.b16 %v1573
    %v1891 = vunpack.c.h.b16 %v1573
    %v1892 = vunpack.c.l.b16 %v1574
    %v1893 = vunpack.c.l.b16 %v1575
    %v1894 = vunpack.c.h.b16 %v1575
    %v1895 = vunpack.c.l.b16 %v1576
    %v1896 = vunpack.c.l.b16 %v1577
    %v1897 = vunpack.c.h.b16 %v1577
    %v1898 = vunpack.c.l.b16 %v1578
    %v1899 = vunpack.c.l.b16 %v1579
    %v1900 = vunpack.c.h.b16 %v1579
    %v1901 = vunpack.c.l.b16 %v1580
    %v1902 = vunpack.c.l.b16 %v1581
    %v1903 = vunpack.c.h.b16 %v1581
    %v1904 = vunpack.c.l.b16 %v1582
    %v1905 = vunpack.c.l.b16 %v1583
    %v1906 = vunpack.c.h.b16 %v1583
    %v1907 = vunpack.c.l.b16 %v1584
    %v1908 = vunpack.c.l.b16 %v1585
    %v1909 = vunpack.c.h.b16 %v1585
    %v1910 = vunpack.c.l.b16 %v1586
    %v1911 = vunpack.c.l.b16 %v1587
    %v1912 = vunpack.c.h.b16 %v1587
    %v1913 = vunpack.c.l.b16 %v1588
    %v1914 = vunpack.c.l.b16 %v1589
    %v1915 = vunpack.c.h.b16 %v1589
    %v1916 = vunpack.c.l.b16 %v1590
    %v1917 = vunpack.c.l.b16 %v1591
    %v1918 = vunpack.c.h.b16 %v1591
    %v1919 = vunpack.c.l.b16 %v1592
    %v1920 = vunpack.c.l.b16 %v1593
    %v1921 = vunpack.c.h.b16 %v1593
    %v1922 = vunpack.c.l.b16 %v1594
    %v1923 = vunpack.c.l.b16 %v1595
    %v1924 = vunpack.c.h.b16 %v1595
    %v1925 = vunpack.c.l.b16 %v1596
    %v1926 = vunpack.c.l.b16 %v1597
    %v1927 = vunpack.c.h.b16 %v1597
    %v1928 = vunpack.c.l.b16 %v1598
    %v1929 = vunpack.c.l.b16 %v1599
    %v1930 = vunpack.c.h.b16 %v1599
    %v1931 = vunpack.c.l.b16 %v1600
    %v1932 = vunpack.c.l.b16 %v1601
    %v1933 = vunpack.c.h.b16 %v1601
    %v1934 = vunpack.c.l.b16 %v1602
    %v1935 = vunpack.c.l.b16 %v1603
    %v1936 = vunpack.c.h.b16 %v1603
    %v1937 = vunpack.c.l.b16 %v1604
    %v1938 = vunpack.c.l.b16 %v1605
    %v1939 = vunpack.c.h.b16 %v1605
    %v1940 = vunpack.c.l.b16 %v1606
    %v1941 = vunpack.c.l.b16 %v1607
    %v1942 = vunpack.c.h.b16 %v1607
    %v1943 = vunpack.c.l.b16 %v1608
    %v1944 = vunpack.c.l.b16 %v1609
    %v1945 = vunpack.c.h.b16 %v1609
    %v1946 = vunpack.c.l.b16 %v1610
    %v1947 = vunpack.c.l.b16 %v1611
    %v1948 = vunpack.c.h.b16 %v1611
    %v1949 = vunpack.c.l.b16 %v1612
    %v1950 = vpack.c.b16 %v1761, %v1758
    %v1951 = vpack.c.b16 %v1762, %v1759
    %v1952 = vpack.c.b16 %v1763, %v1760
    %v1953 = vpack.c.b16 %v1767, %v1764
    %v1954 = vpack.c.b16 %v1768, %v1765
    %v1955 = vpack.c.b16 %v1769, %v1766
    %v1956 = vpack.c.b16 %v1773, %v1770
    %v1957 = vpack.c.b16 %v1774, %v1771
    %v1958 = vpack.c.b16 %v1775, %v1772
    %v1959 = vpack.c.b16 %v1779, %v1776
    %v1960 = vpack.c.b16 %v1780, %v1777
    %v1961 = vpack.c.b16 %v1781, %v1778
    %v1962 = vpack.c.b16 %v1785, %v1782
    %v1963 = vpack.c.b16 %v1786, %v1783
    %v1964 = vpack.c.b16 %v1787, %v1784
    %v1965 = vpack.c.b16 %v1791, %v1788
    %v1966 = vpack.c.b16 %v1792, %v1789
    %v1967 = vpack.c.b16 %v1793, %v1790
    %v1968 = vpack.c.b16 %v1797, %v1794
    %v1969 = vpack.c.b16 %v1798, %v1795
    %v1970 = vpack.c.b16 %v1799, %v1796
    %v1971 = vpack.c.b16 %v1803, %v1800
    %v1972 = vpack.c.b16 %v1804, %v1801
    %v1973 = vpack.c.b16 %v1805, %v1802
    %v1974 = vpack.c.b16 %v1809, %v1806
    %v1975 = vpack.c.b16 %v1810, %v1807
    %v1976 = vpack.c.b16 %v1811, %v1808
    %v1977 = vpack.c.b16 %v1815, %v1812
    %v1978 = vpack.c.b16 %v1816, %v1813
    %v1979 = vpack.c.b16 %v1817, %v1814
    %v1980 = vpack.c.b16 %v1821, %v1818
    %v1981 = vpack.c.b16 %v1822, %v1819
    %v1982 = vpack.c.b16 %v1823, %v1820
    %v1983 = vpack.c.b16 %v1827, %v1824
    %v1984 = vpack.c.b16 %v1828, %v1825
    %v1985 = vpack.c.b16 %v1829, %v1826
    %v1986 = vpack.c.b16 %v1833, %v1830
    %v1987 = vpack.c.b16 %v1834, %v1831
    %v1988 = vpack.c.b16 %v1835, %v1832
    %v1989 = vpack.c.b16 %v1839, %v1836
    %v1990 = vpack.c.b16 %v1840, %v1837
    %v1991 = vpack.c.b16 %v1841, %v1838
    %v1992 = vpack.c.b16 %v1845, %v1842
    %v1993 = vpack.c.b16 %v1846, %v1843
    %v1994 = vpack.c.b16 %v1847, %v1844
    %v1995 = vpack.c.b16 %v1851, %v1848
    %v1996 = vpack.c.b16 %v1852, %v1849
    %v1997 = vpack.c.b16 %v1853, %v1850
    %v1998 = vpack.c.b16 %v1857, %v1854
    %v1999 = vpack.c.b16 %v1858, %v1855
    %v2000 = vpack.c.b16 %v1859, %v1856
    %v2001 = vpack.c.b16 %v1863, %v1860
    %v2002 = vpack.c.b16 %v1864, %v1861
    %v2003 = vpack.c.b16 %v1865, %v1862
    %v2004 = vpack.c.b16 %v1869, %v1866
    %v2005 = vpack.c.b16 %v1870, %v1867
    %v2006 = vpack.c.b16 %v1871, %v1868
    %v2007 = vpack.c.b16 %v1875, %v1872
    %v2008 = vpack.c.b16 %v1876, %v1873
    %v2009 = vpack.c.b16 %v1877, %v1874
    %v2010 = vpack.c.b16 %v1881, %v1878
    %v2011 = vpack.c.b16 %v1882, %v1879
    %v2012 = vpack.c.b16 %v1883, %v1880
    %v2013 = vpack.c.b16 %v1887, %v1884
    %v2014 = vpack.c.b16 %v1888, %v1885
    %v2015 = vpack.c.b16 %v1889, %v1886
    %v2016 = vpack.c.b16 %v1893, %v1890
    %v2017 = vpack.c.b16 %v1894, %v1891
    %v2018 = vpack.c.b16 %v1895, %v1892
    %v2019 = vpack.c.b16 %v1899, %v1896
    %v2020 = vpack.c.b16 %v1900, %v1897
    %v2021 = vpack.c.b16 %v1901, %v1898
    %v2022 = vpack.c.b16 %v1905, %v1902
    %v2023 = vpack.c.b16 %v1906, %v1903
    %v2024 = vpack.c.b16 %v1907, %v1904
    %v2025 = vpack.c.b16 %v1911, %v1908
    %v2026 = vpack.c.b16 %v1912, %v1909
    %v2027 = vpack.c.b16 %v1913, %v1910
    %v2028 = vpack.c.b16 %v1917, %v1914
    %v2029 = vpack.c.b16 %v1918, %v1915
    %v2030 = vpack.c.b16 %v1919, %v1916
    %v2031 = vpack.c.b16 %v1923, %v1920
    %v2032 = vpack.c.b16 %v1924, %v1921
    %v2033 = vpack.c.b16 %v1925, %v1922
    %v2034 = vpack.c.b16 %v1929, %v1926
    %v2035 = vpack.c.b16 %v1930, %v1927
    %v2036 = vpack.c.b16 %v1931, %v1928
    %v2037 = vpack.c.b16 %v1935, %v1932
    %v2038 = vpack.c.b16 %v1936, %v1933
    %v2039 = vpack.c.b16 %v1937, %v1934
    %v2040 = vpack.c.b16 %v1941, %v1938
    %v2041 = vpack.c.b16 %v1942, %v1939
    %v2042 = vpack.c.b16 %v1943, %v1940
    %v2043 = vpack.c.b16 %v1947, %v1944
    %v2044 = vpack.c.b16 %v1948, %v1945
    %v2045 = vpack.c.b16 %v1949, %v1946
    %2142 = vmatprep.subr.bf16.mxu0 %v1951
    %2143 = vmatpush1.bf16.msra.mxu0 %v1950
    %2144 = vmatprep.subr.bf16.mxu0 %v1954
    %2145 = vmatpush1.bf16.msra.mxu0 %v1953
    %2146 = vmatprep.subr.bf16.mxu0 %v1957
    %2147 = vmatpush1.bf16.msra.mxu0 %v1956
    %2148 = vmatprep.subr.bf16.mxu0 %v1960
    %2149 = vmatpush1.bf16.msra.mxu0 %v1959
    %2150 = vmatprep.subr.bf16.mxu0 %v1963
    %2151 = vmatpush1.bf16.msra.mxu0 %v1962
    %2152 = vmatprep.subr.bf16.mxu0 %v1966
    %2153 = vmatpush1.bf16.msra.mxu0 %v1965
    %2154 = vmatprep.subr.bf16.mxu0 %v1969
    %2155 = vmatpush1.bf16.msra.mxu0 %v1968
    %2156 = vmatprep.subr.bf16.mxu0 %v1972
    %2157 = vmatpush1.bf16.msra.mxu0 %v1971
    %2158 = vmatprep.subr.bf16.mxu0 %v1975
    %2159 = vmatpush1.bf16.msra.mxu0 %v1974
    %2160 = vmatprep.subr.bf16.mxu0 %v1978
    %2161 = vmatpush1.bf16.msra.mxu0 %v1977
    %2162 = vmatprep.subr.bf16.mxu0 %v1981
    %2163 = vmatpush1.bf16.msra.mxu0 %v1980
    %2164 = vmatprep.subr.bf16.mxu0 %v1984
    %2165 = vmatpush1.bf16.msra.mxu0 %v1983
    %2166 = vmatprep.subr.bf16.mxu0 %v1987
    %2167 = vmatpush1.bf16.msra.mxu0 %v1986
    %2168 = vmatprep.subr.bf16.mxu0 %v1990
    %2169 = vmatpush1.bf16.msra.mxu0 %v1989
    %2170 = vmatprep.subr.bf16.mxu0 %v1993
    %2171 = vmatpush1.bf16.msra.mxu0 %v1992
    %2172 = vmatprep.subr.bf16.mxu0 %v1996
    %2173 = vmatpush1.bf16.msra.mxu0 %v1995
    %2174 = vmatprep.mubr.bf16.mxu0 %v1482
    %2175 = vmatmul.mubr.bf16.gmra.mrb[0].mxu0 %v1481
    %v2176 = vpop.f32.mrb[0].mxu0
    %v2177 = vadd.f32 %v1618, %v2176
    %v2178 = vpop.f32.mrb[0].mxu0
    %v2179 = vadd.f32 %v1622, %v2178
    %v2180 = vpop.f32.mrb[0].mxu0
    %v2181 = vadd.f32 %v1618, %v2180
    %v2182 = vpop.f32.mrb[0].mxu0
    %v2183 = vadd.f32 %v1622, %v2182
    %2184 = vdwg.mxu0
    %2185 = vmatprep.subr.bf16.mxu0 %v1999
    %2186 = vmatpush1.bf16.msra.mxu0 %v1998
    %2187 = vmatprep.subr.bf16.mxu0 %v2002
    %2188 = vmatpush1.bf16.msra.mxu0 %v2001
    %2189 = vmatprep.subr.bf16.mxu0 %v2005
    %2190 = vmatpush1.bf16.msra.mxu0 %v2004
    %2191 = vmatprep.subr.bf16.mxu0 %v2008
    %2192 = vmatpush1.bf16.msra.mxu0 %v2007
    %2193 = vmatprep.subr.bf16.mxu0 %v2011
    %2194 = vmatpush1.bf16.msra.mxu0 %v2010
    %2195 = vmatprep.subr.bf16.mxu0 %v2014
    %2196 = vmatpush1.bf16.msra.mxu0 %v2013
    %2197 = vmatprep.subr.bf16.mxu0 %v2017
    %2198 = vmatpush1.bf16.msra.mxu0 %v2016
    %2199 = vmatprep.subr.bf16.mxu0 %v2020
    %2200 = vmatpush1.bf16.msra.mxu0 %v2019
    %2201 = vmatprep.subr.bf16.mxu0 %v2023
    %2202 = vmatpush1.bf16.msra.mxu0 %v2022
    %2203 = vmatprep.subr.bf16.mxu0 %v2026
    %2204 = vmatpush1.bf16.msra.mxu0 %v2025
    %2205 = vmatprep.subr.bf16.mxu0 %v2029
    %2206 = vmatpush1.bf16.msra.mxu0 %v2028
    %2207 = vmatprep.subr.bf16.mxu0 %v2032
    %2208 = vmatpush1.bf16.msra.mxu0 %v2031
    %2209 = vmatprep.subr.bf16.mxu0 %v2035
    %2210 = vmatpush1.bf16.msra.mxu0 %v2034
    %2211 = vmatprep.subr.bf16.mxu0 %v2038
    %2212 = vmatpush1.bf16.msra.mxu0 %v2037
    %2213 = vmatprep.subr.bf16.mxu0 %v2041
    %2214 = vmatpush1.bf16.msra.mxu0 %v2040
    %2215 = vmatprep.subr.bf16.mxu0 %v2044
    %2216 = vmatpush1.bf16.msra.mxu0 %v2043
    %2217 = vmatprep.mubr.bf16.mxu0 %v1484
    %2218 = vmatmul.mubr.bf16.gmra.mrb[0].mxu0 %v1483
    %v2219 = vpop.f32.mrb[0].mxu0
    %v2220 = vadd.f32 %v2177, %v2219
    %v2221 = vpop.f32.mrb[0].mxu0
    %v2222 = vadd.f32 %v2179, %v2221
    %v2223 = vpop.f32.mrb[0].mxu0
    %v2224 = vadd.f32 %v2181, %v2223
    %v2225 = vpop.f32.mrb[0].mxu0
    %v2226 = vadd.f32 %v2183, %v2225
    %2227 = vdwg.mxu0
    %2228 = vmatprep.subr.bf16.mxu0 0
    %2229 = vmatpush1.bf16.msra.mxu0 %v1952
    %2230 = vmatprep.subr.bf16.mxu0 0
    %2231 = vmatpush1.bf16.msra.mxu0 %v1955
    %2232 = vmatprep.subr.bf16.mxu0 0
    %2233 = vmatpush1.bf16.msra.mxu0 %v1958
    %2234 = vmatprep.subr.bf16.mxu0 0
    %2235 = vmatpush1.bf16.msra.mxu0 %v1961
    %2236 = vmatprep.subr.bf16.mxu0 0
    %2237 = vmatpush1.bf16.msra.mxu0 %v1964
    %2238 = vmatprep.subr.bf16.mxu0 0
    %2239 = vmatpush1.bf16.msra.mxu0 %v1967
    %2240 = vmatprep.subr.bf16.mxu0 0
    %2241 = vmatpush1.bf16.msra.mxu0 %v1970
    %2242 = vmatprep.subr.bf16.mxu0 0
    %2243 = vmatpush1.bf16.msra.mxu0 %v1973
    %2244 = vmatprep.subr.bf16.mxu0 0
    %2245 = vmatpush1.bf16.msra.mxu0 %v1976
    %2246 = vmatprep.subr.bf16.mxu0 0
    %2247 = vmatpush1.bf16.msra.mxu0 %v1979
    %2248 = vmatprep.subr.bf16.mxu0 0
    %2249 = vmatpush1.bf16.msra.mxu0 %v1982
    %2250 = vmatprep.subr.bf16.mxu0 0
    %2251 = vmatpush1.bf16.msra.mxu0 %v1985
    %2252 = vmatprep.subr.bf16.mxu0 0
    %2253 = vmatpush1.bf16.msra.mxu0 %v1988
    %2254 = vmatprep.subr.bf16.mxu0 0
    %2255 = vmatpush1.bf16.msra.mxu0 %v1991
    %2256 = vmatprep.subr.bf16.mxu0 0
    %2257 = vmatpush1.bf16.msra.mxu0 %v1994
    %2258 = vmatprep.subr.bf16.mxu0 0
    %2259 = vmatpush1.bf16.msra.mxu0 %v1997
    %2260 = vmatprep.mubr.bf16.mxu0 %v1482
    %2261 = vmatmul.mubr.bf16.gmra.mrb[0].mxu0 %v1481
    %v2262 = vpop.f32.mrb[0].mxu0
    %v2263 = vadd.f32 %v1626, %v2262
    %v2264 = vpop.f32.mrb[0].mxu0
    %v2265 = vpop.f32.mrb[0].mxu0
    %v2266 = vadd.f32 %v1626, %v2265
    %v2267 = vpop.f32.mrb[0].mxu0
    %2268 = vdwg.mxu0
    %2269 = vmatprep.subr.bf16.mxu0 0
    %2270 = vmatpush1.bf16.msra.mxu0 %v2000
    %2271 = vmatprep.subr.bf16.mxu0 0
    %2272 = vmatpush1.bf16.msra.mxu0 %v2003
    %2273 = vmatprep.subr.bf16.mxu0 0
    %2274 = vmatpush1.bf16.msra.mxu0 %v2006
    %2275 = vmatprep.subr.bf16.mxu0 0
    %2276 = vmatpush1.bf16.msra.mxu0 %v2009
    %2277 = vmatprep.subr.bf16.mxu0 0
    %2278 = vmatpush1.bf16.msra.mxu0 %v2012
    %2279 = vmatprep.subr.bf16.mxu0 0
    %2280 = vmatpush1.bf16.msra.mxu0 %v2015
    %2281 = vmatprep.subr.bf16.mxu0 0
    %2282 = vmatpush1.bf16.msra.mxu0 %v2018
    %2283 = vmatprep.subr.bf16.mxu0 0
    %2284 = vmatpush1.bf16.msra.mxu0 %v2021
    %2285 = vmatprep.subr.bf16.mxu0 0
    %2286 = vmatpush1.bf16.msra.mxu0 %v2024
    %2287 = vmatprep.subr.bf16.mxu0 0
    %2288 = vmatpush1.bf16.msra.mxu0 %v2027
    %2289 = vmatprep.subr.bf16.mxu0 0
    %2290 = vmatpush1.bf16.msra.mxu0 %v2030
    %2291 = vmatprep.subr.bf16.mxu0 0
    %2292 = vmatpush1.bf16.msra.mxu0 %v2033
    %2293 = vmatprep.subr.bf16.mxu0 0
    %2294 = vmatpush1.bf16.msra.mxu0 %v2036
    %2295 = vmatprep.subr.bf16.mxu0 0
    %2296 = vmatpush1.bf16.msra.mxu0 %v2039
    %2297 = vmatprep.subr.bf16.mxu0 0
    %2298 = vmatpush1.bf16.msra.mxu0 %v2042
    %2299 = vmatprep.subr.bf16.mxu0 0
    %2300 = vmatpush1.bf16.msra.mxu0 %v2045
    %2301 = vmatprep.mubr.bf16.mxu0 %v1484
    %2302 = vmatmul.mubr.bf16.gmra.mrb[0].mxu0 %v1483
    %v2303 = vpop.f32.mrb[0].mxu0
    %v2304 = vadd.f32 %v2263, %v2303
    %v2305 = vpop.f32.mrb[0].mxu0
    %v2306 = vpop.f32.mrb[0].mxu0
    %v2307 = vadd.f32 %v2266, %v2306
    %v2308 = vpop.f32.mrb[0].mxu0
    %2309 = vdwg.mxu0
    %vm2310 = vcmp.ge.f32.partialorder %v2220, 0.0
    %vm2311 = vcmp.ge.f32.partialorder %v2222, 0.0
    %vm2312 = vcmp.ge.f32.partialorder %v2304, 0.0
    %vm2313 = vcmp.ge.f32.partialorder %v2224, 0.0
    %vm2314 = vcmp.ge.f32.partialorder %v2226, 0.0
    %vm2315 = vcmp.ge.f32.partialorder %v2307, 0.0
    %v2316 = vmul.f32 %v2220, 0.22916667
    %v2317 = vmul.f32 %v2222, 0.22916667
    %v2318 = vmul.f32 %v2304, 0.22916667
    %v2319 = vmul.f32 %v2224, 0.22916667
    %v2320 = vmul.f32 %v2226, 0.22916667
    %v2321 = vmul.f32 %v2307, 0.22916667
    %v2322 = vsel %vm2310, %v2220, %v2316
    %v2323 = vsel %vm2311, %v2222, %v2317
    %v2324 = vsel %vm2312, %v2304, %v2318
    %v2325 = vsel %vm2313, %v2224, %v2319
    %v2326 = vsel %vm2314, %v2226, %v2320
    %v2327 = vsel %vm2315, %v2307, %v2321
    %v2328 = vpack.c.bf16 %v2325, %v2322
    %v2329 = vpack.c.bf16 %v2326, %v2323
    %v2330 = vpack.c.bf16 %v2327, %v2324
    %v2331 = vld [vmem:[#allocation12] sm:$0xff]
    %v2332 = vld [vmem:[#allocation12 + $0x8] sm:$0xf]
    %v2333 = vld [vmem:[#allocation12 + $0xc] sm:$0xff]
    %v2334 = vld [vmem:[#allocation12 + $0x14] sm:$0xf]
    %v2335 = vld [vmem:[#allocation12 + $0x18] sm:$0xff]
    %v2336 = vld [vmem:[#allocation12 + $0x20] sm:$0xf]
    %v2337 = vld [vmem:[#allocation12 + $0x24] sm:$0xff]
    %v2338 = vld [vmem:[#allocation12 + $0x2c] sm:$0xf]
    %v2339 = vld [vmem:[#allocation12 + $0x30] sm:$0xff]
    %v2340 = vld [vmem:[#allocation12 + $0x38] sm:$0xf]
    %v2341 = vld [vmem:[#allocation12 + $0x3c] sm:$0xff]
    %v2342 = vld [vmem:[#allocation12 + $0x44] sm:$0xf]
    %v2343 = vld [vmem:[#allocation12 + $0x48] sm:$0xff]
    %v2344 = vld [vmem:[#allocation12 + $0x50] sm:$0xf]
    %v2345 = vld [vmem:[#allocation12 + $0x54] sm:$0xff]
    %v2346 = vld [vmem:[#allocation12 + $0x5c] sm:$0xf]
    %v2347 = vld [vmem:[#allocation12 + $0x60] sm:$0xff]
    %v2348 = vld [vmem:[#allocation12 + $0x68] sm:$0xf]
    %v2349 = vld [vmem:[#allocation12 + $0x6c] sm:$0xff]
    %v2350 = vld [vmem:[#allocation12 + $0x74] sm:$0xf]
    %v2351 = vld [vmem:[#allocation12 + $0x78] sm:$0xff]
    %v2352 = vld [vmem:[#allocation12 + $0x80] sm:$0xf]
    %v2353 = vld [vmem:[#allocation12 + $0x84] sm:$0xff]
    %v2354 = vld [vmem:[#allocation12 + $0x8c] sm:$0xf]
    %v2355 = vld [vmem:[#allocation12 + $0x90] sm:$0xff]
    %v2356 = vld [vmem:[#allocation12 + $0x98] sm:$0xf]
    %v2357 = vld [vmem:[#allocation12 + $0x9c] sm:$0xff]
    %v2358 = vld [vmem:[#allocation12 + $0xa4] sm:$0xf]
    %v2359 = vld [vmem:[#allocation12 + $0xa8] sm:$0xff]
    %v2360 = vld [vmem:[#allocation12 + $0xb0] sm:$0xf]
    %v2361 = vld [vmem:[#allocation12 + $0xb4] sm:$0xff]
    %v2362 = vld [vmem:[#allocation12 + $0xbc] sm:$0xf]
    %v2363 = vld [vmem:[#allocation12 + $0xc0] sm:$0xff]
    %v2364 = vld [vmem:[#allocation12 + $0xc8] sm:$0xf]
    %v2365 = vld [vmem:[#allocation12 + $0xcc] sm:$0xff]
    %v2366 = vld [vmem:[#allocation12 + $0xd4] sm:$0xf]
    %v2367 = vld [vmem:[#allocation12 + $0xd8] sm:$0xff]
    %v2368 = vld [vmem:[#allocation12 + $0xe0] sm:$0xf]
    %v2369 = vld [vmem:[#allocation12 + $0xe4] sm:$0xff]
    %v2370 = vld [vmem:[#allocation12 + $0xec] sm:$0xf]
    %v2371 = vld [vmem:[#allocation12 + $0xf0] sm:$0xff]
    %v2372 = vld [vmem:[#allocation12 + $0xf8] sm:$0xf]
    %v2373 = vld [vmem:[#allocation12 + $0xfc] sm:$0xff]
    %v2374 = vld [vmem:[#allocation12 + $0x104] sm:$0xf]
    %v2375 = vld [vmem:[#allocation12 + $0x108] sm:$0xff]
    %v2376 = vld [vmem:[#allocation12 + $0x110] sm:$0xf]
    %v2377 = vld [vmem:[#allocation12 + $0x114] sm:$0xff]
    %v2378 = vld [vmem:[#allocation12 + $0x11c] sm:$0xf]
    %v2379 = vld [vmem:[#allocation12 + $0x120] sm:$0xff]
    %v2380 = vld [vmem:[#allocation12 + $0x128] sm:$0xf]
    %v2381 = vld [vmem:[#allocation12 + $0x12c] sm:$0xff]
    %v2382 = vld [vmem:[#allocation12 + $0x134] sm:$0xf]
    %v2383 = vld [vmem:[#allocation12 + $0x138] sm:$0xff]
    %v2384 = vld [vmem:[#allocation12 + $0x140] sm:$0xf]
    %v2385 = vld [vmem:[#allocation12 + $0x144] sm:$0xff]
    %v2386 = vld [vmem:[#allocation12 + $0x14c] sm:$0xf]
    %v2387 = vld [vmem:[#allocation12 + $0x150] sm:$0xff]
    %v2388 = vld [vmem:[#allocation12 + $0x158] sm:$0xf]
    %v2389 = vld [vmem:[#allocation12 + $0x15c] sm:$0xff]
    %v2390 = vld [vmem:[#allocation12 + $0x164] sm:$0xf]
    %v2391 = vld [vmem:[#allocation12 + $0x168] sm:$0xff]
    %v2392 = vld [vmem:[#allocation12 + $0x170] sm:$0xf]
    %v2393 = vld [vmem:[#allocation12 + $0x174] sm:$0xff]
    %v2394 = vld [vmem:[#allocation12 + $0x17c] sm:$0xf]
    %v2395 = vld [vmem:[#allocation12 + $0x180] sm:$0xff]
    %v2396 = vld [vmem:[#allocation12 + $0x188] sm:$0xf]
    %v2397 = vld [vmem:[#allocation12 + $0x18c] sm:$0xff]
    %v2398 = vld [vmem:[#allocation12 + $0x194] sm:$0xf]
    %v2399 = vld [vmem:[#allocation12 + $0x198] sm:$0xff]
    %v2400 = vld [vmem:[#allocation12 + $0x1a0] sm:$0xf]
    %v2401 = vld [vmem:[#allocation12 + $0x1a4] sm:$0xff]
    %v2402 = vld [vmem:[#allocation12 + $0x1ac] sm:$0xf]
    %v2403 = vld [vmem:[#allocation12 + $0x1b0] sm:$0xff]
    %v2404 = vld [vmem:[#allocation12 + $0x1b8] sm:$0xf]
    %v2405 = vld [vmem:[#allocation12 + $0x1bc] sm:$0xff]
    %v2406 = vld [vmem:[#allocation12 + $0x1c4] sm:$0xf]
    %v2407 = vld [vmem:[#allocation12 + $0x1c8] sm:$0xff]
    %v2408 = vld [vmem:[#allocation12 + $0x1d0] sm:$0xf]
    %v2409 = vld [vmem:[#allocation12 + $0x1d4] sm:$0xff]
    %v2410 = vld [vmem:[#allocation12 + $0x1dc] sm:$0xf]
    %v2411 = vld [vmem:[#allocation12 + $0x1e0] sm:$0xff]
    %v2412 = vld [vmem:[#allocation12 + $0x1e8] sm:$0xf]
    %v2413 = vld [vmem:[#allocation12 + $0x1ec] sm:$0xff]
    %v2414 = vld [vmem:[#allocation12 + $0x1f4] sm:$0xf]
    %v2415 = vld [vmem:[#allocation12 + $0x1f8] sm:$0xff]
    %v2416 = vld [vmem:[#allocation12 + $0x200] sm:$0xf]
    %v2417 = vld [vmem:[#allocation12 + $0x204] sm:$0xff]
    %v2418 = vld [vmem:[#allocation12 + $0x20c] sm:$0xf]
    %v2419 = vld [vmem:[#allocation12 + $0x210] sm:$0xff]
    %v2420 = vld [vmem:[#allocation12 + $0x218] sm:$0xf]
    %v2421 = vld [vmem:[#allocation12 + $0x21c] sm:$0xff]
    %v2422 = vld [vmem:[#allocation12 + $0x224] sm:$0xf]
    %v2423 = vld [vmem:[#allocation12 + $0x228] sm:$0xff]
    %v2424 = vld [vmem:[#allocation12 + $0x230] sm:$0xf]
    %v2425 = vld [vmem:[#allocation12 + $0x234] sm:$0xff]
    %v2426 = vld [vmem:[#allocation12 + $0x23c] sm:$0xf]
    %v2427 = vld [vmem:[#allocation13] sm:$0x7]
    %v2429 = vlaneseq
    %v2430 = vshrl.u32 %v2429, 7
    %v2431 = vsub.s32 0, %v2430
    %v2432 = vrot.slane %v2427, %v2431
    %v2433 = vlaneseq
    %v2434 = vshrl.u32 %v2433, 7
    %v2435 = vsub.s32 1, %v2434
    %v2436 = vrot.slane %v2427, %v2435
    %v2437 = vlaneseq
    %v2438 = vshrl.u32 %v2437, 7
    %v2439 = vsub.s32 2, %v2438
    %v2440 = vrot.slane %v2427, %v2439
    %v2540 = vunpack.c.l.b16 %v2331
    %v2541 = vunpack.c.h.b16 %v2331
    %v2542 = vunpack.c.l.b16 %v2332
    %v2543 = vunpack.c.l.b16 %v2333
    %v2544 = vunpack.c.h.b16 %v2333
    %v2545 = vunpack.c.l.b16 %v2334
    %v2546 = vunpack.c.l.b16 %v2335
    %v2547 = vunpack.c.h.b16 %v2335
    %v2548 = vunpack.c.l.b16 %v2336
    %v2549 = vunpack.c.l.b16 %v2337
    %v2550 = vunpack.c.h.b16 %v2337
    %v2551 = vunpack.c.l.b16 %v2338
    %v2552 = vunpack.c.l.b16 %v2339
    %v2553 = vunpack.c.h.b16 %v2339
    %v2554 = vunpack.c.l.b16 %v2340
    %v2555 = vunpack.c.l.b16 %v2341
    %v2556 = vunpack.c.h.b16 %v2341
    %v2557 = vunpack.c.l.b16 %v2342
    %v2558 = vunpack.c.l.b16 %v2343
    %v2559 = vunpack.c.h.b16 %v2343
    %v2560 = vunpack.c.l.b16 %v2344
    %v2561 = vunpack.c.l.b16 %v2345
    %v2562 = vunpack.c.h.b16 %v2345
    %v2563 = vunpack.c.l.b16 %v2346
    %v2564 = vunpack.c.l.b16 %v2347
    %v2565 = vunpack.c.h.b16 %v2347
    %v2566 = vunpack.c.l.b16 %v2348
    %v2567 = vunpack.c.l.b16 %v2349
    %v2568 = vunpack.c.h.b16 %v2349
    %v2569 = vunpack.c.l.b16 %v2350
    %v2570 = vunpack.c.l.b16 %v2351
    %v2571 = vunpack.c.h.b16 %v2351
    %v2572 = vunpack.c.l.b16 %v2352
    %v2573 = vunpack.c.l.b16 %v2353
    %v2574 = vunpack.c.h.b16 %v2353
    %v2575 = vunpack.c.l.b16 %v2354
    %v2576 = vunpack.c.l.b16 %v2355
    %v2577 = vunpack.c.h.b16 %v2355
    %v2578 = vunpack.c.l.b16 %v2356
    %v2579 = vunpack.c.l.b16 %v2357
    %v2580 = vunpack.c.h.b16 %v2357
    %v2581 = vunpack.c.l.b16 %v2358
    %v2582 = vunpack.c.l.b16 %v2359
    %v2583 = vunpack.c.h.b16 %v2359
    %v2584 = vunpack.c.l.b16 %v2360
    %v2585 = vunpack.c.l.b16 %v2361
    %v2586 = vunpack.c.h.b16 %v2361
    %v2587 = vunpack.c.l.b16 %v2362
    %v2588 = vunpack.c.l.b16 %v2363
    %v2589 = vunpack.c.h.b16 %v2363
    %v2590 = vunpack.c.l.b16 %v2364
    %v2591 = vunpack.c.l.b16 %v2365
    %v2592 = vunpack.c.h.b16 %v2365
    %v2593 = vunpack.c.l.b16 %v2366
    %v2594 = vunpack.c.l.b16 %v2367
    %v2595 = vunpack.c.h.b16 %v2367
    %v2596 = vunpack.c.l.b16 %v2368
    %v2597 = vunpack.c.l.b16 %v2369
    %v2598 = vunpack.c.h.b16 %v2369
    %v2599 = vunpack.c.l.b16 %v2370
    %v2600 = vunpack.c.l.b16 %v2371
    %v2601 = vunpack.c.h.b16 %v2371
    %v2602 = vunpack.c.l.b16 %v2372
    %v2603 = vunpack.c.l.b16 %v2373
    %v2604 = vunpack.c.h.b16 %v2373
    %v2605 = vunpack.c.l.b16 %v2374
    %v2606 = vunpack.c.l.b16 %v2375
    %v2607 = vunpack.c.h.b16 %v2375
    %v2608 = vunpack.c.l.b16 %v2376
    %v2609 = vunpack.c.l.b16 %v2377
    %v2610 = vunpack.c.h.b16 %v2377
    %v2611 = vunpack.c.l.b16 %v2378
    %v2612 = vunpack.c.l.b16 %v2379
    %v2613 = vunpack.c.h.b16 %v2379
    %v2614 = vunpack.c.l.b16 %v2380
    %v2615 = vunpack.c.l.b16 %v2381
    %v2616 = vunpack.c.h.b16 %v2381
    %v2617 = vunpack.c.l.b16 %v2382
    %v2618 = vunpack.c.l.b16 %v2383
    %v2619 = vunpack.c.h.b16 %v2383
    %v2620 = vunpack.c.l.b16 %v2384
    %v2621 = vunpack.c.l.b16 %v2385
    %v2622 = vunpack.c.h.b16 %v2385
    %v2623 = vunpack.c.l.b16 %v2386
    %v2624 = vunpack.c.l.b16 %v2387
    %v2625 = vunpack.c.h.b16 %v2387
    %v2626 = vunpack.c.l.b16 %v2388
    %v2627 = vunpack.c.l.b16 %v2389
    %v2628 = vunpack.c.h.b16 %v2389
    %v2629 = vunpack.c.l.b16 %v2390
    %v2630 = vunpack.c.l.b16 %v2391
    %v2631 = vunpack.c.h.b16 %v2391
    %v2632 = vunpack.c.l.b16 %v2392
    %v2633 = vunpack.c.l.b16 %v2393
    %v2634 = vunpack.c.h.b16 %v2393
    %v2635 = vunpack.c.l.b16 %v2394
    %v2636 = vunpack.c.l.b16 %v2395
    %v2637 = vunpack.c.h.b16 %v2395
    %v2638 = vunpack.c.l.b16 %v2396
    %v2639 = vunpack.c.l.b16 %v2397
    %v2640 = vunpack.c.h.b16 %v2397
    %v2641 = vunpack.c.l.b16 %v2398
    %v2642 = vunpack.c.l.b16 %v2399
    %v2643 = vunpack.c.h.b16 %v2399
    %v2644 = vunpack.c.l.b16 %v2400
    %v2645 = vunpack.c.l.b16 %v2401
    %v2646 = vunpack.c.h.b16 %v2401
    %v2647 = vunpack.c.l.b16 %v2402
    %v2648 = vunpack.c.l.b16 %v2403
    %v2649 = vunpack.c.h.b16 %v2403
    %v2650 = vunpack.c.l.b16 %v2404
    %v2651 = vunpack.c.l.b16 %v2405
    %v2652 = vunpack.c.h.b16 %v2405
    %v2653 = vunpack.c.l.b16 %v2406
    %v2654 = vunpack.c.l.b16 %v2407
    %v2655 = vunpack.c.h.b16 %v2407
    %v2656 = vunpack.c.l.b16 %v2408
    %v2657 = vunpack.c.l.b16 %v2409
    %v2658 = vunpack.c.h.b16 %v2409
    %v2659 = vunpack.c.l.b16 %v2410
    %v2660 = vunpack.c.l.b16 %v2411
    %v2661 = vunpack.c.h.b16 %v2411
    %v2662 = vunpack.c.l.b16 %v2412
    %v2663 = vunpack.c.l.b16 %v2413
    %v2664 = vunpack.c.h.b16 %v2413
    %v2665 = vunpack.c.l.b16 %v2414
    %v2666 = vunpack.c.l.b16 %v2415
    %v2667 = vunpack.c.h.b16 %v2415
    %v2668 = vunpack.c.l.b16 %v2416
    %v2669 = vunpack.c.l.b16 %v2417
    %v2670 = vunpack.c.h.b16 %v2417
    %v2671 = vunpack.c.l.b16 %v2418
    %v2672 = vunpack.c.l.b16 %v2419
    %v2673 = vunpack.c.h.b16 %v2419
    %v2674 = vunpack.c.l.b16 %v2420
    %v2675 = vunpack.c.l.b16 %v2421
    %v2676 = vunpack.c.h.b16 %v2421
    %v2677 = vunpack.c.l.b16 %v2422
    %v2678 = vunpack.c.l.b16 %v2423
    %v2679 = vunpack.c.h.b16 %v2423
    %v2680 = vunpack.c.l.b16 %v2424
    %v2681 = vunpack.c.l.b16 %v2425
    %v2682 = vunpack.c.h.b16 %v2425
    %v2683 = vunpack.c.l.b16 %v2426
    %v2684 = vpack.c.b16 %v2543, %v2540
    %v2685 = vpack.c.b16 %v2544, %v2541
    %v2686 = vpack.c.b16 %v2545, %v2542
    %v2687 = vpack.c.b16 %v2549, %v2546
    %v2688 = vpack.c.b16 %v2550, %v2547
    %v2689 = vpack.c.b16 %v2551, %v2548
    %v2690 = vpack.c.b16 %v2555, %v2552
    %v2691 = vpack.c.b16 %v2556, %v2553
    %v2692 = vpack.c.b16 %v2557, %v2554
    %v2693 = vpack.c.b16 %v2561, %v2558
    %v2694 = vpack.c.b16 %v2562, %v2559
    %v2695 = vpack.c.b16 %v2563, %v2560
    %v2696 = vpack.c.b16 %v2567, %v2564
    %v2697 = vpack.c.b16 %v2568, %v2565
    %v2698 = vpack.c.b16 %v2569, %v2566
    %v2699 = vpack.c.b16 %v2573, %v2570
    %v2700 = vpack.c.b16 %v2574, %v2571
    %v2701 = vpack.c.b16 %v2575, %v2572
    %v2702 = vpack.c.b16 %v2579, %v2576
    %v2703 = vpack.c.b16 %v2580, %v2577
    %v2704 = vpack.c.b16 %v2581, %v2578
    %v2705 = vpack.c.b16 %v2585, %v2582
    %v2706 = vpack.c.b16 %v2586, %v2583
    %v2707 = vpack.c.b16 %v2587, %v2584
    %v2708 = vpack.c.b16 %v2591, %v2588
    %v2709 = vpack.c.b16 %v2592, %v2589
    %v2710 = vpack.c.b16 %v2593, %v2590
    %v2711 = vpack.c.b16 %v2597, %v2594
    %v2712 = vpack.c.b16 %v2598, %v2595
    %v2713 = vpack.c.b16 %v2599, %v2596
    %v2714 = vpack.c.b16 %v2603, %v2600
    %v2715 = vpack.c.b16 %v2604, %v2601
    %v2716 = vpack.c.b16 %v2605, %v2602
    %v2717 = vpack.c.b16 %v2609, %v2606
    %v2718 = vpack.c.b16 %v2610, %v2607
    %v2719 = vpack.c.b16 %v2611, %v2608
    %v2720 = vpack.c.b16 %v2615, %v2612
    %v2721 = vpack.c.b16 %v2616, %v2613
    %v2722 = vpack.c.b16 %v2617, %v2614
    %v2723 = vpack.c.b16 %v2621, %v2618
    %v2724 = vpack.c.b16 %v2622, %v2619
    %v2725 = vpack.c.b16 %v2623, %v2620
    %v2726 = vpack.c.b16 %v2627, %v2624
    %v2727 = vpack.c.b16 %v2628, %v2625
    %v2728 = vpack.c.b16 %v2629, %v2626
    %v2729 = vpack.c.b16 %v2633, %v2630
    %v2730 = vpack.c.b16 %v2634, %v2631
    %v2731 = vpack.c.b16 %v2635, %v2632
    %v2732 = vpack.c.b16 %v2639, %v2636
    %v2733 = vpack.c.b16 %v2640, %v2637
    %v2734 = vpack.c.b16 %v2641, %v2638
    %v2735 = vpack.c.b16 %v2645, %v2642
    %v2736 = vpack.c.b16 %v2646, %v2643
    %v2737 = vpack.c.b16 %v2647, %v2644
    %v2738 = vpack.c.b16 %v2651, %v2648
    %v2739 = vpack.c.b16 %v2652, %v2649
    %v2740 = vpack.c.b16 %v2653, %v2650
    %v2741 = vpack.c.b16 %v2657, %v2654
    %v2742 = vpack.c.b16 %v2658, %v2655
    %v2743 = vpack.c.b16 %v2659, %v2656
    %v2744 = vpack.c.b16 %v2663, %v2660
    %v2745 = vpack.c.b16 %v2664, %v2661
    %v2746 = vpack.c.b16 %v2665, %v2662
    %v2747 = vpack.c.b16 %v2669, %v2666
    %v2748 = vpack.c.b16 %v2670, %v2667
    %v2749 = vpack.c.b16 %v2671, %v2668
    %v2750 = vpack.c.b16 %v2675, %v2672
    %v2751 = vpack.c.b16 %v2676, %v2673
    %v2752 = vpack.c.b16 %v2677, %v2674
    %v2753 = vpack.c.b16 %v2681, %v2678
    %v2754 = vpack.c.b16 %v2682, %v2679
    %v2755 = vpack.c.b16 %v2683, %v2680
    %2828 = vmatprep.subr.bf16.mxu0 %v2685
    %2829 = vmatpush1.bf16.msra.mxu0 %v2684
    %2830 = vmatprep.subr.bf16.mxu0 %v2688
    %2831 = vmatpush1.bf16.msra.mxu0 %v2687
    %2832 = vmatprep.subr.bf16.mxu0 %v2691
    %2833 = vmatpush1.bf16.msra.mxu0 %v2690
    %2834 = vmatprep.subr.bf16.mxu0 %v2694
    %2835 = vmatpush1.bf16.msra.mxu0 %v2693
    %2836 = vmatprep.subr.bf16.mxu0 %v2697
    %2837 = vmatpush1.bf16.msra.mxu0 %v2696
    %2838 = vmatprep.subr.bf16.mxu0 %v2700
    %2839 = vmatpush1.bf16.msra.mxu0 %v2699
    %2840 = vmatprep.subr.bf16.mxu0 %v2703
    %2841 = vmatpush1.bf16.msra.mxu0 %v2702
    %2842 = vmatprep.subr.bf16.mxu0 %v2706
    %2843 = vmatpush1.bf16.msra.mxu0 %v2705
    %2844 = vmatprep.subr.bf16.mxu0 %v2709
    %2845 = vmatpush1.bf16.msra.mxu0 %v2708
    %2846 = vmatprep.subr.bf16.mxu0 %v2712
    %2847 = vmatpush1.bf16.msra.mxu0 %v2711
    %2848 = vmatprep.subr.bf16.mxu0 %v2715
    %2849 = vmatpush1.bf16.msra.mxu0 %v2714
    %2850 = vmatprep.subr.bf16.mxu0 %v2718
    %2851 = vmatpush1.bf16.msra.mxu0 %v2717
    %2852 = vmatprep.subr.bf16.mxu0 %v2721
    %2853 = vmatpush1.bf16.msra.mxu0 %v2720
    %2854 = vmatprep.subr.bf16.mxu0 %v2724
    %2855 = vmatpush1.bf16.msra.mxu0 %v2723
    %2856 = vmatprep.subr.bf16.mxu0 %v2727
    %2857 = vmatpush1.bf16.msra.mxu0 %v2726
    %2858 = vmatprep.subr.bf16.mxu0 %v2730
    %2859 = vmatpush1.bf16.msra.mxu0 %v2729
    %2860 = vmatprep.mubr.bf16.mxu0 %v2329
    %2861 = vmatmul.mubr.bf16.gmra.mrb[0].mxu0 %v2328
    %v2862 = vpop.f32.mrb[0].mxu0
    %v2863 = vadd.f32 %v2432, %v2862
    %v2864 = vpop.f32.mrb[0].mxu0
    %v2865 = vadd.f32 %v2436, %v2864
    %v2866 = vpop.f32.mrb[0].mxu0
    %v2867 = vadd.f32 %v2432, %v2866
    %v2868 = vpop.f32.mrb[0].mxu0
    %v2869 = vadd.f32 %v2436, %v2868
    %2870 = vdwg.mxu0
    %2871 = vmatprep.subr.bf16.mxu0 %v2733
    %2872 = vmatpush1.bf16.msra.mxu0 %v2732
    %2873 = vmatprep.subr.bf16.mxu0 %v2736
    %2874 = vmatpush1.bf16.msra.mxu0 %v2735
    %2875 = vmatprep.subr.bf16.mxu0 %v2739
    %2876 = vmatpush1.bf16.msra.mxu0 %v2738
    %2877 = vmatprep.subr.bf16.mxu0 %v2742
    %2878 = vmatpush1.bf16.msra.mxu0 %v2741
    %2879 = vmatprep.subr.bf16.mxu0 %v2745
    %2880 = vmatpush1.bf16.msra.mxu0 %v2744
    %2881 = vmatprep.subr.bf16.mxu0 %v2748
    %2882 = vmatpush1.bf16.msra.mxu0 %v2747
    %2883 = vmatprep.subr.bf16.mxu0 %v2751
    %2884 = vmatpush1.bf16.msra.mxu0 %v2750
    %2885 = vmatprep.subr.bf16.mxu0 %v2754
    %2886 = vmatpush1.bf16.msra.mxu0 %v2753
    %2887 = vmatprep.subr.bf16.mxu0 0
    %2888 = vmatpush1.bf16.msra.mxu0 0
    %2889 = vmatprep.subr.bf16.mxu0 0
    %2890 = vmatpush1.bf16.msra.mxu0 0
    %2891 = vmatprep.subr.bf16.mxu0 0
    %2892 = vmatpush1.bf16.msra.mxu0 0
    %2893 = vmatprep.subr.bf16.mxu0 0
    %2894 = vmatpush1.bf16.msra.mxu0 0
    %2895 = vmatprep.subr.bf16.mxu0 0
    %2896 = vmatpush1.bf16.msra.mxu0 0
    %2897 = vmatprep.subr.bf16.mxu0 0
    %2898 = vmatpush1.bf16.msra.mxu0 0
    %2899 = vmatprep.subr.bf16.mxu0 0
    %2900 = vmatpush1.bf16.msra.mxu0 0
    %2901 = vmatprep.subr.bf16.mxu0 0
    %2902 = vmatpush1.bf16.msra.mxu0 0
    %2903 = vmatprep.mubr.bf16.mxu0 0
    %2904 = vmatmul.mubr.bf16.gmra.mrb[0].mxu0 %v2330
    %v2905 = vpop.f32.mrb[0].mxu0
    %v2906 = vadd.f32 %v2863, %v2905
    %v2907 = vpop.f32.mrb[0].mxu0
    %v2908 = vadd.f32 %v2865, %v2907
    %v2909 = vpop.f32.mrb[0].mxu0
    %v2910 = vadd.f32 %v2867, %v2909
    %v2911 = vpop.f32.mrb[0].mxu0
    %v2912 = vadd.f32 %v2869, %v2911
    %2913 = vdwg.mxu0
    %2914 = vmatprep.subr.bf16.mxu0 0
    %2915 = vmatpush1.bf16.msra.mxu0 %v2686
    %2916 = vmatprep.subr.bf16.mxu0 0
    %2917 = vmatpush1.bf16.msra.mxu0 %v2689
    %2918 = vmatprep.subr.bf16.mxu0 0
    %2919 = vmatpush1.bf16.msra.mxu0 %v2692
    %2920 = vmatprep.subr.bf16.mxu0 0
    %2921 = vmatpush1.bf16.msra.mxu0 %v2695
    %2922 = vmatprep.subr.bf16.mxu0 0
    %2923 = vmatpush1.bf16.msra.mxu0 %v2698
    %2924 = vmatprep.subr.bf16.mxu0 0
    %2925 = vmatpush1.bf16.msra.mxu0 %v2701
    %2926 = vmatprep.subr.bf16.mxu0 0
    %2927 = vmatpush1.bf16.msra.mxu0 %v2704
    %2928 = vmatprep.subr.bf16.mxu0 0
    %2929 = vmatpush1.bf16.msra.mxu0 %v2707
    %2930 = vmatprep.subr.bf16.mxu0 0
    %2931 = vmatpush1.bf16.msra.mxu0 %v2710
    %2932 = vmatprep.subr.bf16.mxu0 0
    %2933 = vmatpush1.bf16.msra.mxu0 %v2713
    %2934 = vmatprep.subr.bf16.mxu0 0
    %2935 = vmatpush1.bf16.msra.mxu0 %v2716
    %2936 = vmatprep.subr.bf16.mxu0 0
    %2937 = vmatpush1.bf16.msra.mxu0 %v2719
    %2938 = vmatprep.subr.bf16.mxu0 0
    %2939 = vmatpush1.bf16.msra.mxu0 %v2722
    %2940 = vmatprep.subr.bf16.mxu0 0
    %2941 = vmatpush1.bf16.msra.mxu0 %v2725
    %2942 = vmatprep.subr.bf16.mxu0 0
    %2943 = vmatpush1.bf16.msra.mxu0 %v2728
    %2944 = vmatprep.subr.bf16.mxu0 0
    %2945 = vmatpush1.bf16.msra.mxu0 %v2731
    %2946 = vmatprep.mubr.bf16.mxu0 %v2329
    %2947 = vmatmul.mubr.bf16.gmra.mrb[0].mxu0 %v2328
    %v2948 = vpop.f32.mrb[0].mxu0
    %v2949 = vadd.f32 %v2440, %v2948
    %v2950 = vpop.f32.mrb[0].mxu0
    %v2951 = vpop.f32.mrb[0].mxu0
    %v2952 = vadd.f32 %v2440, %v2951
    %v2953 = vpop.f32.mrb[0].mxu0
    %2954 = vdwg.mxu0
    %2955 = vmatprep.subr.bf16.mxu0 0
    %2956 = vmatpush1.bf16.msra.mxu0 %v2734
    %2957 = vmatprep.subr.bf16.mxu0 0
    %2958 = vmatpush1.bf16.msra.mxu0 %v2737
    %2959 = vmatprep.subr.bf16.mxu0 0
    %2960 = vmatpush1.bf16.msra.mxu0 %v2740
    %2961 = vmatprep.subr.bf16.mxu0 0
    %2962 = vmatpush1.bf16.msra.mxu0 %v2743
    %2963 = vmatprep.subr.bf16.mxu0 0
    %2964 = vmatpush1.bf16.msra.mxu0 %v2746
    %2965 = vmatprep.subr.bf16.mxu0 0
    %2966 = vmatpush1.bf16.msra.mxu0 %v2749
    %2967 = vmatprep.subr.bf16.mxu0 0
    %2968 = vmatpush1.bf16.msra.mxu0 %v2752
    %2969 = vmatprep.subr.bf16.mxu0 0
    %2970 = vmatpush1.bf16.msra.mxu0 %v2755
    %2971 = vmatprep.subr.bf16.mxu0 0
    %2972 = vmatpush1.bf16.msra.mxu0 0
    %2973 = vmatprep.subr.bf16.mxu0 0
    %2974 = vmatpush1.bf16.msra.mxu0 0
    %2975 = vmatprep.subr.bf16.mxu0 0
    %2976 = vmatpush1.bf16.msra.mxu0 0
    %2977 = vmatprep.subr.bf16.mxu0 0
    %2978 = vmatpush1.bf16.msra.mxu0 0
    %2979 = vmatprep.subr.bf16.mxu0 0
    %2980 = vmatpush1.bf16.msra.mxu0 0
    %2981 = vmatprep.subr.bf16.mxu0 0
    %2982 = vmatpush1.bf16.msra.mxu0 0
    %2983 = vmatprep.subr.bf16.mxu0 0
    %2984 = vmatpush1.bf16.msra.mxu0 0
    %2985 = vmatprep.subr.bf16.mxu0 0
    %2986 = vmatpush1.bf16.msra.mxu0 0
    %2987 = vmatprep.mubr.bf16.mxu0 0
    %2988 = vmatmul.mubr.bf16.gmra.mrb[0].mxu0 %v2330
    %v2989 = vpop.f32.mrb[0].mxu0
    %v2990 = vadd.f32 %v2949, %v2989
    %v2991 = vpop.f32.mrb[0].mxu0
    %v2992 = vpop.f32.mrb[0].mxu0
    %v2993 = vadd.f32 %v2952, %v2992
    %v2994 = vpop.f32.mrb[0].mxu0
    %2995 = vdwg.mxu0
    %vm2996 = vcmp.ge.f32.partialorder %v2906, 0.0
    %vm2997 = vcmp.ge.f32.partialorder %v2908, 0.0
    %vm2998 = vcmp.ge.f32.partialorder %v2990, 0.0
    %vm2999 = vcmp.ge.f32.partialorder %v2910, 0.0
    %vm3000 = vcmp.ge.f32.partialorder %v2912, 0.0
    %vm3001 = vcmp.ge.f32.partialorder %v2993, 0.0
    %v3002 = vmul.f32 %v2906, 0.22916667
    %v3003 = vmul.f32 %v2908, 0.22916667
    %v3004 = vmul.f32 %v2990, 0.22916667
    %v3005 = vmul.f32 %v2910, 0.22916667
    %v3006 = vmul.f32 %v2912, 0.22916667
    %v3007 = vmul.f32 %v2993, 0.22916667
    %v3008 = vsel %vm2996, %v2906, %v3002
    %v3009 = vsel %vm2997, %v2908, %v3003
    %v3010 = vsel %vm2998, %v2990, %v3004
    %v3011 = vsel %vm2999, %v2910, %v3005
    %v3012 = vsel %vm3000, %v2912, %v3006
    %v3013 = vsel %vm3001, %v2993, %v3007
    %v3014 = vpack.c.bf16 %v3011, %v3008
    %v3015 = vpack.c.bf16 %v3012, %v3009
    %v3016 = vpack.c.bf16 %v3013, %v3010
    %v3017 = vld [vmem:[#allocation15] sm:$0xf]
    %v3018 = vld [vmem:[#allocation15 + $0x4] sm:$0xf]
    %v3019 = vld [vmem:[#allocation15 + $0x8] sm:$0xf]
    %v3020 = vld [vmem:[#allocation15 + $0xc] sm:$0xf]
    %v3021 = vld [vmem:[#allocation15 + $0x10] sm:$0xf]
    %v3022 = vld [vmem:[#allocation15 + $0x14] sm:$0xf]
    %v3023 = vld [vmem:[#allocation15 + $0x18] sm:$0xf]
    %v3024 = vld [vmem:[#allocation15 + $0x1c] sm:$0xf]
    %v3025 = vld [vmem:[#allocation15 + $0x20] sm:$0xf]
    %v3026 = vld [vmem:[#allocation15 + $0x24] sm:$0xf]
    %v3027 = vld [vmem:[#allocation15 + $0x28] sm:$0xf]
    %v3028 = vld [vmem:[#allocation15 + $0x2c] sm:$0xf]
    %v3029 = vld [vmem:[#allocation15 + $0x30] sm:$0xf]
    %v3030 = vld [vmem:[#allocation15 + $0x34] sm:$0xf]
    %v3031 = vld [vmem:[#allocation15 + $0x38] sm:$0xf]
    %v3032 = vld [vmem:[#allocation15 + $0x3c] sm:$0xf]
    %v3033 = vld [vmem:[#allocation15 + $0x40] sm:$0xf]
    %v3034 = vld [vmem:[#allocation15 + $0x44] sm:$0xf]
    %v3035 = vld [vmem:[#allocation15 + $0x48] sm:$0xf]
    %v3036 = vld [vmem:[#allocation15 + $0x4c] sm:$0xf]
    %v3037 = vld [vmem:[#allocation15 + $0x50] sm:$0xf]
    %v3038 = vld [vmem:[#allocation15 + $0x54] sm:$0xf]
    %v3039 = vld [vmem:[#allocation15 + $0x58] sm:$0xf]
    %v3040 = vld [vmem:[#allocation15 + $0x5c] sm:$0xf]
    %v3041 = vld [vmem:[#allocation15 + $0x60] sm:$0xf]
    %v3042 = vld [vmem:[#allocation15 + $0x64] sm:$0xf]
    %v3043 = vld [vmem:[#allocation15 + $0x68] sm:$0xf]
    %v3044 = vld [vmem:[#allocation15 + $0x6c] sm:$0xf]
    %v3045 = vld [vmem:[#allocation15 + $0x70] sm:$0xf]
    %v3046 = vld [vmem:[#allocation15 + $0x74] sm:$0xf]
    %v3047 = vld [vmem:[#allocation15 + $0x78] sm:$0xf]
    %v3048 = vld [vmem:[#allocation15 + $0x7c] sm:$0xf]
    %v3049 = vld [vmem:[#allocation15 + $0x80] sm:$0xf]
    %v3050 = vld [vmem:[#allocation15 + $0x84] sm:$0xf]
    %v3051 = vld [vmem:[#allocation15 + $0x88] sm:$0xf]
    %v3052 = vld [vmem:[#allocation15 + $0x8c] sm:$0xf]
    %v3053 = vld [vmem:[#allocation15 + $0x90] sm:$0xf]
    %v3054 = vld [vmem:[#allocation15 + $0x94] sm:$0xf]
    %v3055 = vld [vmem:[#allocation15 + $0x98] sm:$0xf]
    %v3056 = vld [vmem:[#allocation15 + $0x9c] sm:$0xf]
    %v3057 = vld [vmem:[#allocation15 + $0xa0] sm:$0xf]
    %v3058 = vld [vmem:[#allocation15 + $0xa4] sm:$0xf]
    %v3059 = vld [vmem:[#allocation15 + $0xa8] sm:$0xf]
    %v3060 = vld [vmem:[#allocation15 + $0xac] sm:$0xf]
    %v3061 = vld [vmem:[#allocation15 + $0xb0] sm:$0xf]
    %v3062 = vld [vmem:[#allocation15 + $0xb4] sm:$0xf]
    %v3063 = vld [vmem:[#allocation15 + $0xb8] sm:$0xf]
    %v3064 = vld [vmem:[#allocation15 + $0xbc] sm:$0xf]
    %v3065 = vld [vmem:[%s10] sm:$0x1]
    %v3067 = vlaneseq
    %v3068 = vshrl.u32 %v3067, 7
    %v3069 = vsub.s32 0, %v3068
    %v3070 = vrot.slane %v3065, %v3069
    %v3120 = vunpack.c.l.b16 %v3017
    %v3121 = vunpack.c.l.b16 %v3018
    %v3122 = vunpack.c.l.b16 %v3019
    %v3123 = vunpack.c.l.b16 %v3020
    %v3124 = vunpack.c.l.b16 %v3021
    %v3125 = vunpack.c.l.b16 %v3022
    %v3126 = vunpack.c.l.b16 %v3023
    %v3127 = vunpack.c.l.b16 %v3024
    %v3128 = vunpack.c.l.b16 %v3025
    %v3129 = vunpack.c.l.b16 %v3026
    %v3130 = vunpack.c.l.b16 %v3027
    %v3131 = vunpack.c.l.b16 %v3028
    %v3132 = vunpack.c.l.b16 %v3029
    %v3133 = vunpack.c.l.b16 %v3030
    %v3134 = vunpack.c.l.b16 %v3031
    %v3135 = vunpack.c.l.b16 %v3032
    %v3136 = vunpack.c.l.b16 %v3033
    %v3137 = vunpack.c.l.b16 %v3034
    %v3138 = vunpack.c.l.b16 %v3035
    %v3139 = vunpack.c.l.b16 %v3036
    %v3140 = vunpack.c.l.b16 %v3037
    %v3141 = vunpack.c.l.b16 %v3038
    %v3142 = vunpack.c.l.b16 %v3039
    %v3143 = vunpack.c.l.b16 %v3040
    %v3144 = vunpack.c.l.b16 %v3041
    %v3145 = vunpack.c.l.b16 %v3042
    %v3146 = vunpack.c.l.b16 %v3043
    %v3147 = vunpack.c.l.b16 %v3044
    %v3148 = vunpack.c.l.b16 %v3045
    %v3149 = vunpack.c.l.b16 %v3046
    %v3150 = vunpack.c.l.b16 %v3047
    %v3151 = vunpack.c.l.b16 %v3048
    %v3152 = vunpack.c.l.b16 %v3049
    %v3153 = vunpack.c.l.b16 %v3050
    %v3154 = vunpack.c.l.b16 %v3051
    %v3155 = vunpack.c.l.b16 %v3052
    %v3156 = vunpack.c.l.b16 %v3053
    %v3157 = vunpack.c.l.b16 %v3054
    %v3158 = vunpack.c.l.b16 %v3055
    %v3159 = vunpack.c.l.b16 %v3056
    %v3160 = vunpack.c.l.b16 %v3057
    %v3161 = vunpack.c.l.b16 %v3058
    %v3162 = vunpack.c.l.b16 %v3059
    %v3163 = vunpack.c.l.b16 %v3060
    %v3164 = vunpack.c.l.b16 %v3061
    %v3165 = vunpack.c.l.b16 %v3062
    %v3166 = vunpack.c.l.b16 %v3063
    %v3167 = vunpack.c.l.b16 %v3064
    %v3168 = vpack.c.b16 %v3121, %v3120
    %v3169 = vpack.c.b16 %v3123, %v3122
    %v3170 = vpack.c.b16 %v3125, %v3124
    %v3171 = vpack.c.b16 %v3127, %v3126
    %v3172 = vpack.c.b16 %v3129, %v3128
    %v3173 = vpack.c.b16 %v3131, %v3130
    %v3174 = vpack.c.b16 %v3133, %v3132
    %v3175 = vpack.c.b16 %v3135, %v3134
    %v3176 = vpack.c.b16 %v3137, %v3136
    %v3177 = vpack.c.b16 %v3139, %v3138
    %v3178 = vpack.c.b16 %v3141, %v3140
    %v3179 = vpack.c.b16 %v3143, %v3142
    %v3180 = vpack.c.b16 %v3145, %v3144
    %v3181 = vpack.c.b16 %v3147, %v3146
    %v3182 = vpack.c.b16 %v3149, %v3148
    %v3183 = vpack.c.b16 %v3151, %v3150
    %v3184 = vpack.c.b16 %v3153, %v3152
    %v3185 = vpack.c.b16 %v3155, %v3154
    %v3186 = vpack.c.b16 %v3157, %v3156
    %v3187 = vpack.c.b16 %v3159, %v3158
    %v3188 = vpack.c.b16 %v3161, %v3160
    %v3189 = vpack.c.b16 %v3163, %v3162
    %v3190 = vpack.c.b16 %v3165, %v3164
    %v3191 = vpack.c.b16 %v3167, %v3166
    %3216 = vmatprep.subr.bf16.mxu0 0
    %3217 = vmatpush1.bf16.msra.mxu0 %v3168
    %3218 = vmatprep.subr.bf16.mxu0 0
    %3219 = vmatpush1.bf16.msra.mxu0 %v3169
    %3220 = vmatprep.subr.bf16.mxu0 0
    %3221 = vmatpush1.bf16.msra.mxu0 %v3170
    %3222 = vmatprep.subr.bf16.mxu0 0
    %3223 = vmatpush1.bf16.msra.mxu0 %v3171
    %3224 = vmatprep.subr.bf16.mxu0 0
    %3225 = vmatpush1.bf16.msra.mxu0 %v3172
    %3226 = vmatprep.subr.bf16.mxu0 0
    %3227 = vmatpush1.bf16.msra.mxu0 %v3173
    %3228 = vmatprep.subr.bf16.mxu0 0
    %3229 = vmatpush1.bf16.msra.mxu0 %v3174
    %3230 = vmatprep.subr.bf16.mxu0 0
    %3231 = vmatpush1.bf16.msra.mxu0 %v3175
    %3232 = vmatprep.subr.bf16.mxu0 0
    %3233 = vmatpush1.bf16.msra.mxu0 %v3176
    %3234 = vmatprep.subr.bf16.mxu0 0
    %3235 = vmatpush1.bf16.msra.mxu0 %v3177
    %3236 = vmatprep.subr.bf16.mxu0 0
    %3237 = vmatpush1.bf16.msra.mxu0 %v3178
    %3238 = vmatprep.subr.bf16.mxu0 0
    %3239 = vmatpush1.bf16.msra.mxu0 %v3179
    %3240 = vmatprep.subr.bf16.mxu0 0
    %3241 = vmatpush1.bf16.msra.mxu0 %v3180
    %3242 = vmatprep.subr.bf16.mxu0 0
    %3243 = vmatpush1.bf16.msra.mxu0 %v3181
    %3244 = vmatprep.subr.bf16.mxu0 0
    %3245 = vmatpush1.bf16.msra.mxu0 %v3182
    %3246 = vmatprep.subr.bf16.mxu0 0
    %3247 = vmatpush1.bf16.msra.mxu0 %v3183
    %3248 = vmatprep.mubr.bf16.mxu0 %v3015
    %3249 = vmatmul.mubr.bf16.gmra.mrb[0].mxu0 %v3014
    %v3250 = vpop.f32.mrb[0].mxu0
    %v3251 = vadd.f32 %v3070, %v3250
    %v3252 = vpop.f32.mrb[0].mxu0
    %v3253 = vpop.f32.mrb[0].mxu0
    %v3254 = vadd.f32 %v3070, %v3253
    %v3255 = vpop.f32.mrb[0].mxu0
    %3256 = vdwg.mxu0
    %3257 = vmatprep.subr.bf16.mxu0 0
    %3258 = vmatpush1.bf16.msra.mxu0 %v3184
    %3259 = vmatprep.subr.bf16.mxu0 0
    %3260 = vmatpush1.bf16.msra.mxu0 %v3185
    %3261 = vmatprep.subr.bf16.mxu0 0
    %3262 = vmatpush1.bf16.msra.mxu0 %v3186
    %3263 = vmatprep.subr.bf16.mxu0 0
    %3264 = vmatpush1.bf16.msra.mxu0 %v3187
    %3265 = vmatprep.subr.bf16.mxu0 0
    %3266 = vmatpush1.bf16.msra.mxu0 %v3188
    %3267 = vmatprep.subr.bf16.mxu0 0
    %3268 = vmatpush1.bf16.msra.mxu0 %v3189
    %3269 = vmatprep.subr.bf16.mxu0 0
    %3270 = vmatpush1.bf16.msra.mxu0 %v3190
    %3271 = vmatprep.subr.bf16.mxu0 0
    %3272 = vmatpush1.bf16.msra.mxu0 %v3191
    %3273 = vmatprep.subr.bf16.mxu0 0
    %3274 = vmatpush1.bf16.msra.mxu0 0
    %3275 = vmatprep.subr.bf16.mxu0 0
    %3276 = vmatpush1.bf16.msra.mxu0 0
    %3277 = vmatprep.subr.bf16.mxu0 0
    %3278 = vmatpush1.bf16.msra.mxu0 0
    %3279 = vmatprep.subr.bf16.mxu0 0
    %3280 = vmatpush1.bf16.msra.mxu0 0
    %3281 = vmatprep.subr.bf16.mxu0 0
    %3282 = vmatpush1.bf16.msra.mxu0 0
    %3283 = vmatprep.subr.bf16.mxu0 0
    %3284 = vmatpush1.bf16.msra.mxu0 0
    %3285 = vmatprep.subr.bf16.mxu0 0
    %3286 = vmatpush1.bf16.msra.mxu0 0
    %3287 = vmatprep.subr.bf16.mxu0 0
    %3288 = vmatpush1.bf16.msra.mxu0 0
    %3289 = vmatprep.mubr.bf16.mxu0 0
    %3290 = vmatmul.mubr.bf16.gmra.mrb[0].mxu0 %v3016
    %v3291 = vpop.f32.mrb[0].mxu0
    %v3292 = vadd.f32 %v3251, %v3291
    %v3293 = vpop.f32.mrb[0].mxu0
    %v3294 = vpop.f32.mrb[0].mxu0
    %v3295 = vadd.f32 %v3254, %v3294
    %v3296 = vpop.f32.mrb[0].mxu0
    %3297 = vdwg.mxu0
    %vm3298 = vcmp.ge.f32.partialorder %v3292, 0.0
    %vm3299 = vcmp.ge.f32.partialorder %v3295, 0.0
    %v3300 = vmul.f32 %v3292, 0.22916667
    %v3301 = vmul.f32 %v3295, 0.22916667
    %v3302 = vsel %vm3298, %v3292, %v3300
    %v3303 = vsel %vm3299, %v3295, %v3301
    %v3304 = vpack.c.bf16 %v3303, %v3302
    %v3305 = vld [vmem:[%s11] sm:$0xf]
    %v3306 = vld [vmem:[%s11 + $0x4] sm:$0xf]
    %v3307 = vld [vmem:[%s11 + $0x8] sm:$0xf]
    %v3308 = vld [vmem:[%s11 + $0xc] sm:$0xf]
    %v3309 = vld [vmem:[%s11 + $0x10] sm:$0xf]
    %v3310 = vld [vmem:[%s11 + $0x14] sm:$0xf]
    %v3311 = vld [vmem:[%s11 + $0x18] sm:$0xf]
    %v3312 = vld [vmem:[%s11 + $0x1c] sm:$0xf]
    %v3313 = vld [vmem:[%s11 + $0x20] sm:$0xf]
    %v3314 = vld [vmem:[%s11 + $0x24] sm:$0xf]
    %v3315 = vld [vmem:[%s11 + $0x28] sm:$0xf]
    %v3316 = vld [vmem:[%s11 + $0x2c] sm:$0xf]
    %v3317 = vld [vmem:[%s11 + $0x30] sm:$0xf]
    %v3318 = vld [vmem:[%s11 + $0x34] sm:$0xf]
    %v3319 = vld [vmem:[%s11 + $0x38] sm:$0xf]
    %v3320 = vld [vmem:[%s11 + $0x3c] sm:$0xf]
    %v3321 = vld [vmem:[%s12] sm:$0x1]
    %v3323 = vlaneseq
    %v3324 = vshrl.u32 %v3323, 7
    %v3325 = vsub.s32 0, %v3324
    %v3326 = vrot.slane %v3321, %v3325
    %v3344 = vunpack.c.l.b16 %v3305
    %v3345 = vunpack.c.l.b16 %v3306
    %v3346 = vunpack.c.l.b16 %v3307
    %v3347 = vunpack.c.l.b16 %v3308
    %v3348 = vunpack.c.l.b16 %v3309
    %v3349 = vunpack.c.l.b16 %v3310
    %v3350 = vunpack.c.l.b16 %v3311
    %v3351 = vunpack.c.l.b16 %v3312
    %v3352 = vunpack.c.l.b16 %v3313
    %v3353 = vunpack.c.l.b16 %v3314
    %v3354 = vunpack.c.l.b16 %v3315
    %v3355 = vunpack.c.l.b16 %v3316
    %v3356 = vunpack.c.l.b16 %v3317
    %v3357 = vunpack.c.l.b16 %v3318
    %v3358 = vunpack.c.l.b16 %v3319
    %v3359 = vunpack.c.l.b16 %v3320
    %v3360 = vpack.c.b16 %v3345, %v3344
    %v3361 = vpack.c.b16 %v3347, %v3346
    %v3362 = vpack.c.b16 %v3349, %v3348
    %v3363 = vpack.c.b16 %v3351, %v3350
    %v3364 = vpack.c.b16 %v3353, %v3352
    %v3365 = vpack.c.b16 %v3355, %v3354
    %v3366 = vpack.c.b16 %v3357, %v3356
    %v3367 = vpack.c.b16 %v3359, %v3358
    %3376 = vmatprep.subr.bf16.mxu0 0
    %3377 = vmatpush1.bf16.msra.mxu0 %v3360
    %3378 = vmatprep.subr.bf16.mxu0 0
    %3379 = vmatpush1.bf16.msra.mxu0 %v3361
    %3380 = vmatprep.subr.bf16.mxu0 0
    %3381 = vmatpush1.bf16.msra.mxu0 %v3362
    %3382 = vmatprep.subr.bf16.mxu0 0
    %3383 = vmatpush1.bf16.msra.mxu0 %v3363
    %3384 = vmatprep.subr.bf16.mxu0 0
    %3385 = vmatpush1.bf16.msra.mxu0 %v3364
    %3386 = vmatprep.subr.bf16.mxu0 0
    %3387 = vmatpush1.bf16.msra.mxu0 %v3365
    %3388 = vmatprep.subr.bf16.mxu0 0
    %3389 = vmatpush1.bf16.msra.mxu0 %v3366
    %3390 = vmatprep.subr.bf16.mxu0 0
    %3391 = vmatpush1.bf16.msra.mxu0 %v3367
    %3392 = vmatprep.subr.bf16.mxu0 0
    %3393 = vmatpush1.bf16.msra.mxu0 0
    %3394 = vmatprep.subr.bf16.mxu0 0
    %3395 = vmatpush1.bf16.msra.mxu0 0
    %3396 = vmatprep.subr.bf16.mxu0 0
    %3397 = vmatpush1.bf16.msra.mxu0 0
    %3398 = vmatprep.subr.bf16.mxu0 0
    %3399 = vmatpush1.bf16.msra.mxu0 0
    %3400 = vmatprep.subr.bf16.mxu0 0
    %3401 = vmatpush1.bf16.msra.mxu0 0
    %3402 = vmatprep.subr.bf16.mxu0 0
    %3403 = vmatpush1.bf16.msra.mxu0 0
    %3404 = vmatprep.subr.bf16.mxu0 0
    %3405 = vmatpush1.bf16.msra.mxu0 0
    %3406 = vmatprep.subr.bf16.mxu0 0
    %3407 = vmatpush1.bf16.msra.mxu0 0
    %3408 = vmatprep.mubr.bf16.mxu0 0
    %3409 = vmatmul.mubr.bf16.gmra.mrb[0].mxu0 %v3304
    %v3410 = vpop.f32.mrb[0].mxu0
    %v3411 = vadd.f32 %v3326, %v3410
    %v3412 = vpop.f32.mrb[0].mxu0
    %v3413 = vpop.f32.mrb[0].mxu0
    %v3414 = vadd.f32 %v3326, %v3413
    %v3415 = vpop.f32.mrb[0].mxu0
    %3416 = vdwg.mxu0
    %3417 = vst [vmem:[%s13] sm:$0xff] %v3411
    %3418 = vst [vmem:[%s13 + $0x8] sm:$0xff] %v3414
    // Predicated region
    $region90: #{nn_regressor_dropout_forward.1} parent=1 // pred_check
      _
    $region91: #{nn_regressor_dropout_forward.1} parent=1 // pred_check_branch
      %3420 = sbr.rel (0) target = $region93
    $region92: #{nn_regressor_dropout_forward.1} parent=1 // pred_region
      _
    $region93: #{nn_regressor_dropout_forward.1} parent=1 // pred_fallthru
      _
    // Predicated region
    $region94: #{nn_regressor_dropout_forward.1} parent=1 // pred_check
      _
    $region95: #{nn_regressor_dropout_forward.1} parent=1 // pred_check_branch
      %3422 = sbr.rel (0) target = $region97
    $region96: #{nn_regressor_dropout_forward.1} parent=1 // pred_region
      _
    $region97: #{nn_regressor_dropout_forward.1} parent=1 // pred_fallthru
      _
    %3423 = vsyncpa [#allocation3], 1
    %3424 = vsyncpa [#allocation5], 1
    %3425 = vsyncpa [#allocation8], 1
    %3426 = vsyncpa [#allocation11], 1
    %3427 = vsyncpa [#allocation14], 1

</llo_original>
